<compile_context>
chip_gen: v7x
topology: tpu7x:2x2x1
jax: 0.10.0
libtpu: 0.0.40
codegen_flags: <defaults>
</compile_context>

<pallas_src>
import jax
import jax.numpy as jnp
from jax.experimental import pallas as pl
from jax.experimental.pallas import tpu as pltpu

LANE = 128


def _round_up(n, m):
    return ((n + m - 1) // m) * m


def _lstm_fc_kernel(x_ref, wih_ref, whh_ref, b_ref, wfc_ref, bfc_ref, out_ref):
    """x_ref: (T*B, I) t-major.  Gate order along the 4H axis is [i, f, o, g]."""
    TB = x_ref.shape[0]
    H = whh_ref.shape[0]              # hidden size (64 -> 2H = one 128-lane tile)
    B = out_ref.shape[0]
    T = TB // B
    H2 = 2 * H
    wdt = whh_ref.dtype               # f32 or bf16 (matmul operands only)

    # ---- Hoisted input projection: one (T*B, I) @ (I, 4H) MXU call ---------
    # Combined bias (b_ih + b_hh) added once, in f32; off the serial chain.
    xp = jnp.dot(x_ref[...].astype(wih_ref.dtype), wih_ref[...],
                 preferred_element_type=jnp.float32) + b_ref[...]   # (T*B, 4H)

    h = jnp.zeros((B, H), jnp.float32)
    c = jnp.zeros((B, H), jnp.float32)
    # Lane mask for the [o | g] tile: lanes < H -> sigmoid(o), else tanh(g).
    lane = jax.lax.broadcasted_iota(jnp.int32, (B, H2), 1)

    # ---- Recurrence: T is a trace-time constant, fully unrolled -------------
    # h/c stay in vregs; the only serial MXU work is the (B,H) @ (H,4H) dot.
    # whh_ref is indexed inside the loop (streamed per step, never kept live
    # across the unrolled steps).
    for t in range(T):
        gates = xp[t * B:(t + 1) * B, :] + jnp.dot(
            h.astype(wdt), whh_ref[...], preferred_element_type=jnp.float32)
        t_if = jax.nn.sigmoid(gates[:, :H2])                          # [ i | f ]
        og = gates[:, H2:]
        t_og = jnp.where(lane < H, jax.nn.sigmoid(og), jnp.tanh(og))  # [ o | g ]
        i_g = t_if[:, :H]
        f_g = t_if[:, H:]
        o_g = t_og[:, :H]
        g_g = t_og[:, H:]
        c = f_g * c + i_g * g_g
        h = o_g * jnp.tanh(c)

    # ---- Classifier head; output block is lane-dense (classes padded to 128)
    logits = jnp.dot(h.astype(wfc_ref.dtype), wfc_ref[...],
                     preferred_element_type=jnp.float32) + bfc_ref[...]
    out_ref[...] = logits.astype(out_ref.dtype)


def pack_params(params, weight_dtype=jnp.float32):
    """One-time repack of PyTorch-layout LSTM/Linear params for the kernel.

    Gate chunks are reordered from PyTorch's [i, f, g, o] to [i, f, o, g] so the
    first 128-lane gate tile is all-sigmoid and the second needs a single masked
    sigmoid/tanh blend.  Matmul operands may be stored bf16 (MXU-native); biases
    stay f32.  FC weight/bias are zero-padded to 128 classes so the kernel's
    output store is lane-dense (padded logits are exactly 0 and sliced away).
    Hoisted out of the per-call path on purpose (zero-risk win for repeated use).
    """
    w_ih, w_hh, b_ih, b_hh, w_fc, b_fc = (
        params["w_ih"], params["w_hh"], params["b_ih"],
        params["b_hh"], params["w_fc"], params["b_fc"])
    H = w_ih.shape[0] // 4
    C = w_fc.shape[0]
    Cp = _round_up(C, LANE)
    perm = jnp.array([0, 1, 3, 2])                 # [i,f,g,o] -> [i,f,o,g]

    def gate_cols(w):                              # (4H, d) -> (d, 4H) reordered
        d = w.shape[1]
        wt = jnp.transpose(w).reshape(d, 4, H)
        return jnp.take(wt, perm, axis=1).reshape(d, 4 * H)

    bias = jnp.take((b_ih + b_hh).reshape(4, H), perm, axis=0).reshape(1, 4 * H)

    return {
        "wih": gate_cols(w_ih).astype(weight_dtype),                     # (I, 4H)
        "whh": gate_cols(w_hh).astype(weight_dtype),                     # (H, 4H)
        "b": bias.astype(jnp.float32),                                   # (1, 4H)
        "wfc": jnp.pad(jnp.transpose(w_fc),
                       ((0, 0), (0, Cp - C))).astype(weight_dtype),      # (H, Cp)
        "bfc": jnp.pad(b_fc.reshape(1, C),
                       ((0, 0), (0, Cp - C))).astype(jnp.float32),       # (1, Cp)
    }


def lstm_squat_classifier(x, packed, num_classes):
    """x: (B, T, I) float32, batch_first like the PyTorch module."""
    B, T, I = x.shape
    Cp = packed["wfc"].shape[1]

    # t-major 2-D layout so the kernel's per-step access is a contiguous static
    # row slice (no in-kernel reshape / mid-axis gather).
    x2 = jnp.transpose(x, (1, 0, 2)).reshape(T * B, I).astype(jnp.float32)

    vmem = pl.BlockSpec(memory_space=pltpu.MemorySpace.VMEM)
    out = pl.pallas_call(
        _lstm_fc_kernel,
        out_shape=jax.ShapeDtypeStruct((B, Cp), jnp.float32),
        # Total footprint (x + weights + out) < 0.5 MB -> whole arrays live in
        # VMEM for the single invocation; no grid, no pipeline overhead.
        in_specs=[vmem] * 6,
        out_specs=vmem,
    )(x2, packed["wih"], packed["whh"], packed["b"], packed["wfc"], packed["bfc"])
    return out[:, :num_classes]


def lstm_squat_classifier_ref(x, params):
    """Pure-JAX reference (mirrors torch.nn.LSTM + Linear forward)."""
    w_ih, w_hh, b_ih, b_hh, w_fc, b_fc = (
        params["w_ih"], params["w_hh"], params["b_ih"],
        params["b_hh"], params["w_fc"], params["b_fc"])
    B, T, I = x.shape
    H = w_hh.shape[1]

    def step(carry, x_t):
        h, c = carry
        gates = x_t @ w_ih.T + b_ih + h @ w_hh.T + b_hh
        i = jax.nn.sigmoid(gates[:, 0 * H:1 * H])
        f = jax.nn.sigmoid(gates[:, 1 * H:2 * H])
        g = jnp.tanh(gates[:, 2 * H:3 * H])
        o = jax.nn.sigmoid(gates[:, 3 * H:4 * H])
        c = f * c + i * g
        h = o * jnp.tanh(c)
        return (h, c), None

    h0 = jnp.zeros((B, H), jnp.float32)
    c0 = jnp.zeros((B, H), jnp.float32)
    (hT, _), _ = jax.lax.scan(step, (h0, c0), jnp.transpose(x, (1, 0, 2)))
    return hT @ w_fc.T + b_fc


def init_params(key, input_size=133, hidden_size=64, num_classes=7):
    k1, k2, k3, k4, k5, k6 = jax.random.split(key, 6)
    H, I, C = hidden_size, input_size, num_classes

    def xavier(k, shape):
        fan_out, fan_in = shape
        bound = jnp.sqrt(6.0 / (fan_in + fan_out))
        return jax.random.uniform(k, shape, jnp.float32, -bound, bound)

    # Deterministic synthetic init (matches shapes of nn.LSTM / nn.Linear).
    return {
        "w_ih": xavier(k1, (4 * H, I)),
        "w_hh": xavier(k2, (4 * H, H)),
        "b_ih": 0.01 * jax.random.normal(k3, (4 * H,), jnp.float32),
        "b_hh": 0.01 * jax.random.normal(k4, (4 * H,), jnp.float32),
        "w_fc": xavier(k5, (C, H)),
        "b_fc": 0.01 * jax.random.normal(k6, (C,), jnp.float32),
    }


if __name__ == "__main__":
    key = jax.random.PRNGKey(0)
    kp, kx = jax.random.split(key)

    B, T, I, H, C = 2, 8, 133, 64, 7
    params = init_params(kp, input_size=I, hidden_size=H, num_classes=C)
    x = jax.random.normal(kx, (B, T, I), jnp.float32)

    ref = lstm_squat_classifier_ref(x, params)
    fwd = jax.jit(lstm_squat_classifier, static_argnums=2)

    # f32 weight path: exact parity with the reference.
    packed_f32 = pack_params(params, jnp.float32)
    out_f32 = jax.block_until_ready(fwd(x, packed_f32, C))
    assert out_f32.shape == (B, C)
    assert jnp.allclose(out_f32, ref, atol=1e-4, rtol=1e-4), (out_f32, ref)

    # bf16 weight storage (MXU operands only; state / gate / bias math stays f32).
    packed_bf16 = pack_params(params, jnp.bfloat16)
    out_bf16 = jax.block_until_ready(fwd(x, packed_bf16, C))
    assert out_bf16.shape == (B, C)
    assert jnp.allclose(out_bf16, ref, atol=5e-2, rtol=5e-2), (out_bf16, ref)

    print("KERNEL_OK")
</pallas_src>

<mosaic_0001>
module attributes {stable_mosaic.version = 11 : i64} {
  func.func @_lstm_fc_kernel(%arg0: memref<16x133xf32, #tpu.memory_space<vmem>>, %arg1: memref<133x256xf32, #tpu.memory_space<vmem>>, %arg2: memref<64x256xf32, #tpu.memory_space<vmem>>, %arg3: memref<1x256xf32, #tpu.memory_space<vmem>>, %arg4: memref<64x128xf32, #tpu.memory_space<vmem>>, %arg5: memref<1x128xf32, #tpu.memory_space<vmem>>, %arg6: memref<2x128xf32, #tpu.memory_space<vmem>>) attributes {dimension_semantics = [], scalar_prefetch = 0 : i64, scratch_operands = 0 : i64, tpu.core_type = #tpu.core_type<tc>} {
    %c0 = arith.constant 0 : index
    %c0_0 = arith.constant 0 : index
    %0 = vector.load %arg0[%c0, %c0_0] : memref<16x133xf32, #tpu.memory_space<vmem>>, vector<16x133xf32>
    %c0_1 = arith.constant 0 : index
    %c0_2 = arith.constant 0 : index
    %1 = vector.load %arg1[%c0_1, %c0_2] : memref<133x256xf32, #tpu.memory_space<vmem>>, vector<133x256xf32>
    %cst = arith.constant dense<0.000000e+00> : vector<16x256xf32>
    %2 = tpu.matmul %0, %1, %cst {dimension_numbers = #tpu.dot_dimension_numbers<[1], [0], [0], [1], [0, 0, 1, 1], [], []>} : vector<16x133xf32>, vector<133x256xf32>, vector<16x256xf32> -> vector<16x256xf32>
    %c0_3 = arith.constant 0 : index
    %c0_4 = arith.constant 0 : index
    %3 = vector.load %arg3[%c0_3, %c0_4] : memref<1x256xf32, #tpu.memory_space<vmem>>, vector<1x256xf32>
    %4 = vector.broadcast %3 : vector<1x256xf32> to vector<16x256xf32>
    %5 = arith.addf %2, %4 : vector<16x256xf32>
    %cst_5 = arith.constant 0.000000e+00 : f32
    %6 = vector.broadcast %cst_5 : f32 to vector<2x64xf32>
    %cst_6 = arith.constant 0.000000e+00 : f32
    %7 = vector.broadcast %cst_6 : f32 to vector<2x64xf32>
    %8 = tpu.iota {dimensions = array<i32: 1>} : vector<2x128xi32>
    %9 = vector.extract_strided_slice %5 {offsets = [0, 0], sizes = [2, 256], strides = [1, 1]} : vector<16x256xf32> to vector<2x256xf32>
    %c0_7 = arith.constant 0 : index
    %c0_8 = arith.constant 0 : index
    %10 = vector.load %arg2[%c0_7, %c0_8] : memref<64x256xf32, #tpu.memory_space<vmem>>, vector<64x256xf32>
    %cst_9 = arith.constant dense<0.000000e+00> : vector<2x256xf32>
    %11 = tpu.matmul %6, %10, %cst_9 {dimension_numbers = #tpu.dot_dimension_numbers<[1], [0], [0], [1], [0, 0, 1, 1], [], []>} : vector<2x64xf32>, vector<64x256xf32>, vector<2x256xf32> -> vector<2x256xf32>
    %12 = arith.addf %9, %11 : vector<2x256xf32>
    %13 = vector.extract_strided_slice %12 {offsets = [0, 0], sizes = [2, 128], strides = [1, 1]} : vector<2x256xf32> to vector<2x128xf32>
    %14 = arith.negf %13 : vector<2x128xf32>
    %15 = math.exp %14 : vector<2x128xf32>
    %cst_10 = arith.constant 1.000000e+00 : f32
    %16 = vector.broadcast %cst_10 : f32 to vector<2x128xf32>
    %17 = arith.addf %16, %15 : vector<2x128xf32>
    %18 = arith.divf %16, %17 : vector<2x128xf32>
    %19 = vector.extract_strided_slice %12 {offsets = [0, 128], sizes = [2, 128], strides = [1, 1]} : vector<2x256xf32> to vector<2x128xf32>
    %c64_i32 = arith.constant 64 : i32
    %20 = vector.broadcast %c64_i32 : i32 to vector<2x128xi32>
    %21 = arith.cmpi slt, %8, %20 : vector<2x128xi32>
    %22 = arith.negf %19 : vector<2x128xf32>
    %23 = math.exp %22 : vector<2x128xf32>
    %cst_11 = arith.constant 1.000000e+00 : f32
    %24 = vector.broadcast %cst_11 : f32 to vector<2x128xf32>
    %25 = arith.addf %24, %23 : vector<2x128xf32>
    %26 = arith.divf %24, %25 : vector<2x128xf32>
    %27 = math.tanh %19 : vector<2x128xf32>
    %28 = arith.select %21, %26, %27 : vector<2x128xi1>, vector<2x128xf32>
    %29 = vector.extract_strided_slice %18 {offsets = [0, 0], sizes = [2, 64], strides = [1, 1]} : vector<2x128xf32> to vector<2x64xf32>
    %30 = vector.extract_strided_slice %18 {offsets = [0, 64], sizes = [2, 64], strides = [1, 1]} : vector<2x128xf32> to vector<2x64xf32>
    %31 = vector.extract_strided_slice %28 {offsets = [0, 0], sizes = [2, 64], strides = [1, 1]} : vector<2x128xf32> to vector<2x64xf32>
    %32 = vector.extract_strided_slice %28 {offsets = [0, 64], sizes = [2, 64], strides = [1, 1]} : vector<2x128xf32> to vector<2x64xf32>
    %33 = arith.mulf %30, %7 : vector<2x64xf32>
    %34 = arith.mulf %29, %32 : vector<2x64xf32>
    %35 = arith.addf %33, %34 : vector<2x64xf32>
    %36 = math.tanh %35 : vector<2x64xf32>
    %37 = arith.mulf %31, %36 : vector<2x64xf32>
    %38 = vector.extract_strided_slice %5 {offsets = [2, 0], sizes = [2, 256], strides = [1, 1]} : vector<16x256xf32> to vector<2x256xf32>
    %c0_12 = arith.constant 0 : index
    %c0_13 = arith.constant 0 : index
    %39 = vector.load %arg2[%c0_12, %c0_13] : memref<64x256xf32, #tpu.memory_space<vmem>>, vector<64x256xf32>
    %cst_14 = arith.constant dense<0.000000e+00> : vector<2x256xf32>
    %40 = tpu.matmul %37, %39, %cst_14 {dimension_numbers = #tpu.dot_dimension_numbers<[1], [0], [0], [1], [0, 0, 1, 1], [], []>} : vector<2x64xf32>, vector<64x256xf32>, vector<2x256xf32> -> vector<2x256xf32>
    %41 = arith.addf %38, %40 : vector<2x256xf32>
    %42 = vector.extract_strided_slice %41 {offsets = [0, 0], sizes = [2, 128], strides = [1, 1]} : vector<2x256xf32> to vector<2x128xf32>
    %43 = arith.negf %42 : vector<2x128xf32>
    %44 = math.exp %43 : vector<2x128xf32>
    %cst_15 = arith.constant 1.000000e+00 : f32
    %45 = vector.broadcast %cst_15 : f32 to vector<2x128xf32>
    %46 = arith.addf %45, %44 : vector<2x128xf32>
    %47 = arith.divf %45, %46 : vector<2x128xf32>
    %48 = vector.extract_strided_slice %41 {offsets = [0, 128], sizes = [2, 128], strides = [1, 1]} : vector<2x256xf32> to vector<2x128xf32>
    %c64_i32_16 = arith.constant 64 : i32
    %49 = vector.broadcast %c64_i32_16 : i32 to vector<2x128xi32>
    %50 = arith.cmpi slt, %8, %49 : vector<2x128xi32>
    %51 = arith.negf %48 : vector<2x128xf32>
    %52 = math.exp %51 : vector<2x128xf32>
    %cst_17 = arith.constant 1.000000e+00 : f32
    %53 = vector.broadcast %cst_17 : f32 to vector<2x128xf32>
    %54 = arith.addf %53, %52 : vector<2x128xf32>
    %55 = arith.divf %53, %54 : vector<2x128xf32>
    %56 = math.tanh %48 : vector<2x128xf32>
    %57 = arith.select %50, %55, %56 : vector<2x128xi1>, vector<2x128xf32>
    %58 = vector.extract_strided_slice %47 {offsets = [0, 0], sizes = [2, 64], strides = [1, 1]} : vector<2x128xf32> to vector<2x64xf32>
    %59 = vector.extract_strided_slice %47 {offsets = [0, 64], sizes = [2, 64], strides = [1, 1]} : vector<2x128xf32> to vector<2x64xf32>
    %60 = vector.extract_strided_slice %57 {offsets = [0, 0], sizes = [2, 64], strides = [1, 1]} : vector<2x128xf32> to vector<2x64xf32>
    %61 = vector.extract_strided_slice %57 {offsets = [0, 64], sizes = [2, 64], strides = [1, 1]} : vector<2x128xf32> to vector<2x64xf32>
    %62 = arith.mulf %59, %35 : vector<2x64xf32>
    %63 = arith.mulf %58, %61 : vector<2x64xf32>
    %64 = arith.addf %62, %63 : vector<2x64xf32>
    %65 = math.tanh %64 : vector<2x64xf32>
    %66 = arith.mulf %60, %65 : vector<2x64xf32>
    %67 = vector.extract_strided_slice %5 {offsets = [4, 0], sizes = [2, 256], strides = [1, 1]} : vector<16x256xf32> to vector<2x256xf32>
    %c0_18 = arith.constant 0 : index
    %c0_19 = arith.constant 0 : index
    %68 = vector.load %arg2[%c0_18, %c0_19] : memref<64x256xf32, #tpu.memory_space<vmem>>, vector<64x256xf32>
    %cst_20 = arith.constant dense<0.000000e+00> : vector<2x256xf32>
    %69 = tpu.matmul %66, %68, %cst_20 {dimension_numbers = #tpu.dot_dimension_numbers<[1], [0], [0], [1], [0, 0, 1, 1], [], []>} : vector<2x64xf32>, vector<64x256xf32>, vector<2x256xf32> -> vector<2x256xf32>
    %70 = arith.addf %67, %69 : vector<2x256xf32>
    %71 = vector.extract_strided_slice %70 {offsets = [0, 0], sizes = [2, 128], strides = [1, 1]} : vector<2x256xf32> to vector<2x128xf32>
    %72 = arith.negf %71 : vector<2x128xf32>
    %73 = math.exp %72 : vector<2x128xf32>
    %cst_21 = arith.constant 1.000000e+00 : f32
    %74 = vector.broadcast %cst_21 : f32 to vector<2x128xf32>
    %75 = arith.addf %74, %73 : vector<2x128xf32>
    %76 = arith.divf %74, %75 : vector<2x128xf32>
    %77 = vector.extract_strided_slice %70 {offsets = [0, 128], sizes = [2, 128], strides = [1, 1]} : vector<2x256xf32> to vector<2x128xf32>
    %c64_i32_22 = arith.constant 64 : i32
    %78 = vector.broadcast %c64_i32_22 : i32 to vector<2x128xi32>
    %79 = arith.cmpi slt, %8, %78 : vector<2x128xi32>
    %80 = arith.negf %77 : vector<2x128xf32>
    %81 = math.exp %80 : vector<2x128xf32>
    %cst_23 = arith.constant 1.000000e+00 : f32
    %82 = vector.broadcast %cst_23 : f32 to vector<2x128xf32>
    %83 = arith.addf %82, %81 : vector<2x128xf32>
    %84 = arith.divf %82, %83 : vector<2x128xf32>
    %85 = math.tanh %77 : vector<2x128xf32>
    %86 = arith.select %79, %84, %85 : vector<2x128xi1>, vector<2x128xf32>
    %87 = vector.extract_strided_slice %76 {offsets = [0, 0], sizes = [2, 64], strides = [1, 1]} : vector<2x128xf32> to vector<2x64xf32>
    %88 = vector.extract_strided_slice %76 {offsets = [0, 64], sizes = [2, 64], strides = [1, 1]} : vector<2x128xf32> to vector<2x64xf32>
    %89 = vector.extract_strided_slice %86 {offsets = [0, 0], sizes = [2, 64], strides = [1, 1]} : vector<2x128xf32> to vector<2x64xf32>
    %90 = vector.extract_strided_slice %86 {offsets = [0, 64], sizes = [2, 64], strides = [1, 1]} : vector<2x128xf32> to vector<2x64xf32>
    %91 = arith.mulf %88, %64 : vector<2x64xf32>
    %92 = arith.mulf %87, %90 : vector<2x64xf32>
    %93 = arith.addf %91, %92 : vector<2x64xf32>
    %94 = math.tanh %93 : vector<2x64xf32>
    %95 = arith.mulf %89, %94 : vector<2x64xf32>
    %96 = vector.extract_strided_slice %5 {offsets = [6, 0], sizes = [2, 256], strides = [1, 1]} : vector<16x256xf32> to vector<2x256xf32>
    %c0_24 = arith.constant 0 : index
    %c0_25 = arith.constant 0 : index
    %97 = vector.load %arg2[%c0_24, %c0_25] : memref<64x256xf32, #tpu.memory_space<vmem>>, vector<64x256xf32>
    %cst_26 = arith.constant dense<0.000000e+00> : vector<2x256xf32>
    %98 = tpu.matmul %95, %97, %cst_26 {dimension_numbers = #tpu.dot_dimension_numbers<[1], [0], [0], [1], [0, 0, 1, 1], [], []>} : vector<2x64xf32>, vector<64x256xf32>, vector<2x256xf32> -> vector<2x256xf32>
    %99 = arith.addf %96, %98 : vector<2x256xf32>
    %100 = vector.extract_strided_slice %99 {offsets = [0, 0], sizes = [2, 128], strides = [1, 1]} : vector<2x256xf32> to vector<2x128xf32>
    %101 = arith.negf %100 : vector<2x128xf32>
    %102 = math.exp %101 : vector<2x128xf32>
    %cst_27 = arith.constant 1.000000e+00 : f32
    %103 = vector.broadcast %cst_27 : f32 to vector<2x128xf32>
    %104 = arith.addf %103, %102 : vector<2x128xf32>
    %105 = arith.divf %103, %104 : vector<2x128xf32>
    %106 = vector.extract_strided_slice %99 {offsets = [0, 128], sizes = [2, 128], strides = [1, 1]} : vector<2x256xf32> to vector<2x128xf32>
    %c64_i32_28 = arith.constant 64 : i32
    %107 = vector.broadcast %c64_i32_28 : i32 to vector<2x128xi32>
    %108 = arith.cmpi slt, %8, %107 : vector<2x128xi32>
    %109 = arith.negf %106 : vector<2x128xf32>
    %110 = math.exp %109 : vector<2x128xf32>
    %cst_29 = arith.constant 1.000000e+00 : f32
    %111 = vector.broadcast %cst_29 : f32 to vector<2x128xf32>
    %112 = arith.addf %111, %110 : vector<2x128xf32>
    %113 = arith.divf %111, %112 : vector<2x128xf32>
    %114 = math.tanh %106 : vector<2x128xf32>
    %115 = arith.select %108, %113, %114 : vector<2x128xi1>, vector<2x128xf32>
    %116 = vector.extract_strided_slice %105 {offsets = [0, 0], sizes = [2, 64], strides = [1, 1]} : vector<2x128xf32> to vector<2x64xf32>
    %117 = vector.extract_strided_slice %105 {offsets = [0, 64], sizes = [2, 64], strides = [1, 1]} : vector<2x128xf32> to vector<2x64xf32>
    %118 = vector.extract_strided_slice %115 {offsets = [0, 0], sizes = [2, 64], strides = [1, 1]} : vector<2x128xf32> to vector<2x64xf32>
    %119 = vector.extract_strided_slice %115 {offsets = [0, 64], sizes = [2, 64], strides = [1, 1]} : vector<2x128xf32> to vector<2x64xf32>
    %120 = arith.mulf %117, %93 : vector<2x64xf32>
    %121 = arith.mulf %116, %119 : vector<2x64xf32>
    %122 = arith.addf %120, %121 : vector<2x64xf32>
    %123 = math.tanh %122 : vector<2x64xf32>
    %124 = arith.mulf %118, %123 : vector<2x64xf32>
    %125 = vector.extract_strided_slice %5 {offsets = [8, 0], sizes = [2, 256], strides = [1, 1]} : vector<16x256xf32> to vector<2x256xf32>
    %c0_30 = arith.constant 0 : index
    %c0_31 = arith.constant 0 : index
    %126 = vector.load %arg2[%c0_30, %c0_31] : memref<64x256xf32, #tpu.memory_space<vmem>>, vector<64x256xf32>
    %cst_32 = arith.constant dense<0.000000e+00> : vector<2x256xf32>
    %127 = tpu.matmul %124, %126, %cst_32 {dimension_numbers = #tpu.dot_dimension_numbers<[1], [0], [0], [1], [0, 0, 1, 1], [], []>} : vector<2x64xf32>, vector<64x256xf32>, vector<2x256xf32> -> vector<2x256xf32>
    %128 = arith.addf %125, %127 : vector<2x256xf32>
    %129 = vector.extract_strided_slice %128 {offsets = [0, 0], sizes = [2, 128], strides = [1, 1]} : vector<2x256xf32> to vector<2x128xf32>
    %130 = arith.negf %129 : vector<2x128xf32>
    %131 = math.exp %130 : vector<2x128xf32>
    %cst_33 = arith.constant 1.000000e+00 : f32
    %132 = vector.broadcast %cst_33 : f32 to vector<2x128xf32>
    %133 = arith.addf %132, %131 : vector<2x128xf32>
    %134 = arith.divf %132, %133 : vector<2x128xf32>
    %135 = vector.extract_strided_slice %128 {offsets = [0, 128], sizes = [2, 128], strides = [1, 1]} : vector<2x256xf32> to vector<2x128xf32>
    %c64_i32_34 = arith.constant 64 : i32
    %136 = vector.broadcast %c64_i32_34 : i32 to vector<2x128xi32>
    %137 = arith.cmpi slt, %8, %136 : vector<2x128xi32>
    %138 = arith.negf %135 : vector<2x128xf32>
    %139 = math.exp %138 : vector<2x128xf32>
    %cst_35 = arith.constant 1.000000e+00 : f32
    %140 = vector.broadcast %cst_35 : f32 to vector<2x128xf32>
    %141 = arith.addf %140, %139 : vector<2x128xf32>
    %142 = arith.divf %140, %141 : vector<2x128xf32>
    %143 = math.tanh %135 : vector<2x128xf32>
    %144 = arith.select %137, %142, %143 : vector<2x128xi1>, vector<2x128xf32>
    %145 = vector.extract_strided_slice %134 {offsets = [0, 0], sizes = [2, 64], strides = [1, 1]} : vector<2x128xf32> to vector<2x64xf32>
    %146 = vector.extract_strided_slice %134 {offsets = [0, 64], sizes = [2, 64], strides = [1, 1]} : vector<2x128xf32> to vector<2x64xf32>
    %147 = vector.extract_strided_slice %144 {offsets = [0, 0], sizes = [2, 64], strides = [1, 1]} : vector<2x128xf32> to vector<2x64xf32>
    %148 = vector.extract_strided_slice %144 {offsets = [0, 64], sizes = [2, 64], strides = [1, 1]} : vector<2x128xf32> to vector<2x64xf32>
    %149 = arith.mulf %146, %122 : vector<2x64xf32>
    %150 = arith.mulf %145, %148 : vector<2x64xf32>
    %151 = arith.addf %149, %150 : vector<2x64xf32>
    %152 = math.tanh %151 : vector<2x64xf32>
    %153 = arith.mulf %147, %152 : vector<2x64xf32>
    %154 = vector.extract_strided_slice %5 {offsets = [10, 0], sizes = [2, 256], strides = [1, 1]} : vector<16x256xf32> to vector<2x256xf32>
    %c0_36 = arith.constant 0 : index
    %c0_37 = arith.constant 0 : index
    %155 = vector.load %arg2[%c0_36, %c0_37] : memref<64x256xf32, #tpu.memory_space<vmem>>, vector<64x256xf32>
    %cst_38 = arith.constant dense<0.000000e+00> : vector<2x256xf32>
    %156 = tpu.matmul %153, %155, %cst_38 {dimension_numbers = #tpu.dot_dimension_numbers<[1], [0], [0], [1], [0, 0, 1, 1], [], []>} : vector<2x64xf32>, vector<64x256xf32>, vector<2x256xf32> -> vector<2x256xf32>
    %157 = arith.addf %154, %156 : vector<2x256xf32>
    %158 = vector.extract_strided_slice %157 {offsets = [0, 0], sizes = [2, 128], strides = [1, 1]} : vector<2x256xf32> to vector<2x128xf32>
    %159 = arith.negf %158 : vector<2x128xf32>
    %160 = math.exp %159 : vector<2x128xf32>
    %cst_39 = arith.constant 1.000000e+00 : f32
    %161 = vector.broadcast %cst_39 : f32 to vector<2x128xf32>
    %162 = arith.addf %161, %160 : vector<2x128xf32>
    %163 = arith.divf %161, %162 : vector<2x128xf32>
    %164 = vector.extract_strided_slice %157 {offsets = [0, 128], sizes = [2, 128], strides = [1, 1]} : vector<2x256xf32> to vector<2x128xf32>
    %c64_i32_40 = arith.constant 64 : i32
    %165 = vector.broadcast %c64_i32_40 : i32 to vector<2x128xi32>
    %166 = arith.cmpi slt, %8, %165 : vector<2x128xi32>
    %167 = arith.negf %164 : vector<2x128xf32>
    %168 = math.exp %167 : vector<2x128xf32>
    %cst_41 = arith.constant 1.000000e+00 : f32
    %169 = vector.broadcast %cst_41 : f32 to vector<2x128xf32>
    %170 = arith.addf %169, %168 : vector<2x128xf32>
    %171 = arith.divf %169, %170 : vector<2x128xf32>
    %172 = math.tanh %164 : vector<2x128xf32>
    %173 = arith.select %166, %171, %172 : vector<2x128xi1>, vector<2x128xf32>
    %174 = vector.extract_strided_slice %163 {offsets = [0, 0], sizes = [2, 64], strides = [1, 1]} : vector<2x128xf32> to vector<2x64xf32>
    %175 = vector.extract_strided_slice %163 {offsets = [0, 64], sizes = [2, 64], strides = [1, 1]} : vector<2x128xf32> to vector<2x64xf32>
    %176 = vector.extract_strided_slice %173 {offsets = [0, 0], sizes = [2, 64], strides = [1, 1]} : vector<2x128xf32> to vector<2x64xf32>
    %177 = vector.extract_strided_slice %173 {offsets = [0, 64], sizes = [2, 64], strides = [1, 1]} : vector<2x128xf32> to vector<2x64xf32>
    %178 = arith.mulf %175, %151 : vector<2x64xf32>
    %179 = arith.mulf %174, %177 : vector<2x64xf32>
    %180 = arith.addf %178, %179 : vector<2x64xf32>
    %181 = math.tanh %180 : vector<2x64xf32>
    %182 = arith.mulf %176, %181 : vector<2x64xf32>
    %183 = vector.extract_strided_slice %5 {offsets = [12, 0], sizes = [2, 256], strides = [1, 1]} : vector<16x256xf32> to vector<2x256xf32>
    %c0_42 = arith.constant 0 : index
    %c0_43 = arith.constant 0 : index
    %184 = vector.load %arg2[%c0_42, %c0_43] : memref<64x256xf32, #tpu.memory_space<vmem>>, vector<64x256xf32>
    %cst_44 = arith.constant dense<0.000000e+00> : vector<2x256xf32>
    %185 = tpu.matmul %182, %184, %cst_44 {dimension_numbers = #tpu.dot_dimension_numbers<[1], [0], [0], [1], [0, 0, 1, 1], [], []>} : vector<2x64xf32>, vector<64x256xf32>, vector<2x256xf32> -> vector<2x256xf32>
    %186 = arith.addf %183, %185 : vector<2x256xf32>
    %187 = vector.extract_strided_slice %186 {offsets = [0, 0], sizes = [2, 128], strides = [1, 1]} : vector<2x256xf32> to vector<2x128xf32>
    %188 = arith.negf %187 : vector<2x128xf32>
    %189 = math.exp %188 : vector<2x128xf32>
    %cst_45 = arith.constant 1.000000e+00 : f32
    %190 = vector.broadcast %cst_45 : f32 to vector<2x128xf32>
    %191 = arith.addf %190, %189 : vector<2x128xf32>
    %192 = arith.divf %190, %191 : vector<2x128xf32>
    %193 = vector.extract_strided_slice %186 {offsets = [0, 128], sizes = [2, 128], strides = [1, 1]} : vector<2x256xf32> to vector<2x128xf32>
    %c64_i32_46 = arith.constant 64 : i32
    %194 = vector.broadcast %c64_i32_46 : i32 to vector<2x128xi32>
    %195 = arith.cmpi slt, %8, %194 : vector<2x128xi32>
    %196 = arith.negf %193 : vector<2x128xf32>
    %197 = math.exp %196 : vector<2x128xf32>
    %cst_47 = arith.constant 1.000000e+00 : f32
    %198 = vector.broadcast %cst_47 : f32 to vector<2x128xf32>
    %199 = arith.addf %198, %197 : vector<2x128xf32>
    %200 = arith.divf %198, %199 : vector<2x128xf32>
    %201 = math.tanh %193 : vector<2x128xf32>
    %202 = arith.select %195, %200, %201 : vector<2x128xi1>, vector<2x128xf32>
    %203 = vector.extract_strided_slice %192 {offsets = [0, 0], sizes = [2, 64], strides = [1, 1]} : vector<2x128xf32> to vector<2x64xf32>
    %204 = vector.extract_strided_slice %192 {offsets = [0, 64], sizes = [2, 64], strides = [1, 1]} : vector<2x128xf32> to vector<2x64xf32>
    %205 = vector.extract_strided_slice %202 {offsets = [0, 0], sizes = [2, 64], strides = [1, 1]} : vector<2x128xf32> to vector<2x64xf32>
    %206 = vector.extract_strided_slice %202 {offsets = [0, 64], sizes = [2, 64], strides = [1, 1]} : vector<2x128xf32> to vector<2x64xf32>
    %207 = arith.mulf %204, %180 : vector<2x64xf32>
    %208 = arith.mulf %203, %206 : vector<2x64xf32>
    %209 = arith.addf %207, %208 : vector<2x64xf32>
    %210 = math.tanh %209 : vector<2x64xf32>
    %211 = arith.mulf %205, %210 : vector<2x64xf32>
    %212 = vector.extract_strided_slice %5 {offsets = [14, 0], sizes = [2, 256], strides = [1, 1]} : vector<16x256xf32> to vector<2x256xf32>
    %c0_48 = arith.constant 0 : index
    %c0_49 = arith.constant 0 : index
    %213 = vector.load %arg2[%c0_48, %c0_49] : memref<64x256xf32, #tpu.memory_space<vmem>>, vector<64x256xf32>
    %cst_50 = arith.constant dense<0.000000e+00> : vector<2x256xf32>
    %214 = tpu.matmul %211, %213, %cst_50 {dimension_numbers = #tpu.dot_dimension_numbers<[1], [0], [0], [1], [0, 0, 1, 1], [], []>} : vector<2x64xf32>, vector<64x256xf32>, vector<2x256xf32> -> vector<2x256xf32>
    %215 = arith.addf %212, %214 : vector<2x256xf32>
    %216 = vector.extract_strided_slice %215 {offsets = [0, 0], sizes = [2, 128], strides = [1, 1]} : vector<2x256xf32> to vector<2x128xf32>
    %217 = arith.negf %216 : vector<2x128xf32>
    %218 = math.exp %217 : vector<2x128xf32>
    %cst_51 = arith.constant 1.000000e+00 : f32
    %219 = vector.broadcast %cst_51 : f32 to vector<2x128xf32>
    %220 = arith.addf %219, %218 : vector<2x128xf32>
    %221 = arith.divf %219, %220 : vector<2x128xf32>
    %222 = vector.extract_strided_slice %215 {offsets = [0, 128], sizes = [2, 128], strides = [1, 1]} : vector<2x256xf32> to vector<2x128xf32>
    %c64_i32_52 = arith.constant 64 : i32
    %223 = vector.broadcast %c64_i32_52 : i32 to vector<2x128xi32>
    %224 = arith.cmpi slt, %8, %223 : vector<2x128xi32>
    %225 = arith.negf %222 : vector<2x128xf32>
    %226 = math.exp %225 : vector<2x128xf32>
    %cst_53 = arith.constant 1.000000e+00 : f32
    %227 = vector.broadcast %cst_53 : f32 to vector<2x128xf32>
    %228 = arith.addf %227, %226 : vector<2x128xf32>
    %229 = arith.divf %227, %228 : vector<2x128xf32>
    %230 = math.tanh %222 : vector<2x128xf32>
    %231 = arith.select %224, %229, %230 : vector<2x128xi1>, vector<2x128xf32>
    %232 = vector.extract_strided_slice %221 {offsets = [0, 0], sizes = [2, 64], strides = [1, 1]} : vector<2x128xf32> to vector<2x64xf32>
    %233 = vector.extract_strided_slice %221 {offsets = [0, 64], sizes = [2, 64], strides = [1, 1]} : vector<2x128xf32> to vector<2x64xf32>
    %234 = vector.extract_strided_slice %231 {offsets = [0, 0], sizes = [2, 64], strides = [1, 1]} : vector<2x128xf32> to vector<2x64xf32>
    %235 = vector.extract_strided_slice %231 {offsets = [0, 64], sizes = [2, 64], strides = [1, 1]} : vector<2x128xf32> to vector<2x64xf32>
    %236 = arith.mulf %233, %209 : vector<2x64xf32>
    %237 = arith.mulf %232, %235 : vector<2x64xf32>
    %238 = arith.addf %236, %237 : vector<2x64xf32>
    %239 = math.tanh %238 : vector<2x64xf32>
    %240 = arith.mulf %234, %239 : vector<2x64xf32>
    %c0_54 = arith.constant 0 : index
    %c0_55 = arith.constant 0 : index
    %241 = vector.load %arg4[%c0_54, %c0_55] : memref<64x128xf32, #tpu.memory_space<vmem>>, vector<64x128xf32>
    %cst_56 = arith.constant dense<0.000000e+00> : vector<2x128xf32>
    %242 = tpu.matmul %240, %241, %cst_56 {dimension_numbers = #tpu.dot_dimension_numbers<[1], [0], [0], [1], [0, 0, 1, 1], [], []>} : vector<2x64xf32>, vector<64x128xf32>, vector<2x128xf32> -> vector<2x128xf32>
    %c0_57 = arith.constant 0 : index
    %c0_58 = arith.constant 0 : index
    %243 = vector.load %arg5[%c0_57, %c0_58] : memref<1x128xf32, #tpu.memory_space<vmem>>, vector<1x128xf32>
    %244 = vector.broadcast %243 : vector<1x128xf32> to vector<2x128xf32>
    %245 = arith.addf %242, %244 : vector<2x128xf32>
    %c0_59 = arith.constant 0 : index
    %c0_60 = arith.constant 0 : index
    %246 = vector.load %arg6[%c0_59, %c0_60] : memref<2x128xf32, #tpu.memory_space<vmem>>, vector<2x128xf32>
    tpu.vector_store %arg6[%c0_59, %c0_60], %245 {strides = array<i32>} : memref<2x128xf32, #tpu.memory_space<vmem>>, vector<2x128xf32>,
    return
  }
}

</mosaic_0001>

<llo_original>
// kernel: lstm_squat_classifier.1
$region0: #{lstm_squat_classifier.1}
  #allocation0 [shape = 'u32[]', space=smem, size = 0x4, offset = 0x4, fixed_abs, tag = 'smem constant byte address 0x4 - core index']
  #allocation1 [shape = 'u32[144,128]{1,0:T(1,128)}', space=vmem, size = 0x12000, scoped, tag = 'internal scratch']
  %s0 = inlined_call_operand.vmem [shape: f32[16,133], index: 0, kind: input, shape index: {}]
  %s1 = inlined_call_operand.hbm [shape: f32[133,256], index: 1, kind: input, shape index: {}]
  %s2 = inlined_call_operand.vmem [shape: f32[64,256], index: 2, kind: input, shape index: {}]
  %s3 = inlined_call_operand.vmem [shape: f32[1,256], index: 3, kind: input, shape index: {}]
  %s4 = inlined_call_operand.hbm [shape: f32[64,128], index: 4, kind: input, shape index: {}]
  %s5 = inlined_call_operand.vmem [shape: f32[1,128], index: 5, kind: input, shape index: {}]
  %s6 = inlined_call_operand.hbm [shape: f32[2,128], index: 6, kind: output, shape index: {}]
  %s7 = sld [smem:[#allocation0]]
  $region42: #{lstm_squat_classifier.1} parent=0
    _
  %s9 = ssub.s32 1, %s7
  %s10 = scalar_select 0, %s9, %s7
  $region1: #{lstm_squat_classifier.1} parent=0
    #allocation2 [shape = 'u8[139264]{0}', space=vmem, size = 0x22000, scoped, tag = 'input window, operand 1, single buffered']
    #allocation3 [shape = 's32[1]{0}', space=sflag, size = 0x4, scoped, tag = 'scoped memory for lstm_squat_classifier.1']
    #allocation4 [shape = 's32[1]{0}', space=sflag, size = 0x4, scoped, tag = 'scoped memory for lstm_squat_classifier.1']
    #allocation5 [shape = 'u8[32768]{0}', space=vmem, size = 0x8000, scoped, tag = 'input window, operand 4, single buffered']
    #allocation6 [shape = 's32[1]{0}', space=sflag, size = 0x4, scoped, tag = 'scoped memory for lstm_squat_classifier.1']
    #allocation7 [shape = 'u8[1024]{0}', space=vmem, size = 0x400, scoped, tag = 'output window, operand 0, single buffered']
    %11 = vsyncpa [#allocation3], 0
    %12 = vsyncpa [#allocation6], 0
    %13 = vsyncpa [#allocation4], 0
    // Predicated region
    $region2: #{lstm_squat_classifier.1} parent=1 // pred_check
      _
    $region3: #{lstm_squat_classifier.1} parent=1 // pred_check_branch
      %15 = sbr.rel (0) target = $region5
    $region4: #{lstm_squat_classifier.1} parent=1 // pred_region
      _
    $region5: #{lstm_squat_classifier.1} parent=1 // pred_fallthru
      _
    // Predicated region
    $region6: #{lstm_squat_classifier.1} parent=1 // pred_check
      _
    $region7: #{lstm_squat_classifier.1} parent=1 // pred_check_branch
      %17 = sbr.rel (0) target = $region9
    $region8: #{lstm_squat_classifier.1} parent=1 // pred_region
      %s19 = ssub.s32 4352, 4352
      %20 = vsyncadd [#allocation3], %s19
      %s21 = sshll.u32 [#allocation2], 4
      %s22 = int_to_ptr.vmem [resolvable:$true] %s21
      %27 = dma.hbm_to_vmem [thread:$0]  %s1, 4352, %s22, [#allocation3], 256, 256, 16
    $region9: #{lstm_squat_classifier.1} parent=1 // pred_fallthru
      _
    // Predicated region
    $region10: #{lstm_squat_classifier.1} parent=1 // pred_check
      _
    $region11: #{lstm_squat_classifier.1} parent=1 // pred_check_branch
      %29 = sbr.rel (0) target = $region13
    $region12: #{lstm_squat_classifier.1} parent=1 // pred_region
      _
    $region13: #{lstm_squat_classifier.1} parent=1 // pred_fallthru
      _
    // Predicated region
    $region14: #{lstm_squat_classifier.1} parent=1 // pred_check
      _
    $region15: #{lstm_squat_classifier.1} parent=1 // pred_check_branch
      %31 = sbr.rel (0) target = $region17
    $region16: #{lstm_squat_classifier.1} parent=1 // pred_region
      _
    $region17: #{lstm_squat_classifier.1} parent=1 // pred_fallthru
      _
    // Predicated region
    $region18: #{lstm_squat_classifier.1} parent=1 // pred_check
      _
    $region19: #{lstm_squat_classifier.1} parent=1 // pred_check_branch
      %33 = sbr.rel (0) target = $region21
    $region20: #{lstm_squat_classifier.1} parent=1 // pred_region
      %s35 = ssub.s32 1024, 1024
      %36 = vsyncadd [#allocation6], %s35
      %s37 = sshll.u32 [#allocation5], 4
      %s38 = int_to_ptr.vmem [resolvable:$true] %s37
      %43 = dma.hbm_to_vmem [thread:$0]  %s4, 1024, %s38, [#allocation6], 128, 128, 8
    $region21: #{lstm_squat_classifier.1} parent=1 // pred_fallthru
      _
    // Predicated region
    $region22: #{lstm_squat_classifier.1} parent=1 // pred_check
      _
    $region23: #{lstm_squat_classifier.1} parent=1 // pred_check_branch
      %45 = sbr.rel (0) target = $region25
    $region24: #{lstm_squat_classifier.1} parent=1 // pred_region
      _
    $region25: #{lstm_squat_classifier.1} parent=1 // pred_fallthru
      _
    // Predicated region
    $region26: #{lstm_squat_classifier.1} parent=1 // pred_check
      _
    $region27: #{lstm_squat_classifier.1} parent=1 // pred_check_branch
      %47 = sbr.rel (0) target = $region29
    $region28: #{lstm_squat_classifier.1} parent=1 // pred_region
      %48 = dma.done [#allocation3], 4352
    $region29: #{lstm_squat_classifier.1} parent=1 // pred_fallthru
      _
    // Predicated region
    $region30: #{lstm_squat_classifier.1} parent=1 // pred_check
      _
    $region31: #{lstm_squat_classifier.1} parent=1 // pred_check_branch
      %50 = sbr.rel (0) target = $region33
    $region32: #{lstm_squat_classifier.1} parent=1 // pred_region
      %51 = dma.done [#allocation6], 1024
    $region33: #{lstm_squat_classifier.1} parent=1 // pred_fallthru
      _
    %v52 = vld [vmem:[%s0] sm:$0xff]
    %v53 = vld [vmem:[%s0 + $0x8] sm:$0xff]
    %v54 = vld [vmem:[%s0 + $0x10] sm:$0xff]
    %v55 = vld [vmem:[%s0 + $0x18] sm:$0xff]
    %v56 = vld [vmem:[#allocation2] sm:$0xff]
    %v57 = vld [vmem:[#allocation2 + $0x8] sm:$0xff]
    %v58 = vld [vmem:[#allocation2 + $0x10] sm:$0xff]
    %v59 = vld [vmem:[#allocation2 + $0x18] sm:$0xff]
    %v60 = vld [vmem:[#allocation2 + $0x20] sm:$0xff]
    %v61 = vld [vmem:[#allocation2 + $0x28] sm:$0xff]
    %v62 = vld [vmem:[#allocation2 + $0x30] sm:$0xff]
    %v63 = vld [vmem:[#allocation2 + $0x38] sm:$0xff]
    %v64 = vld [vmem:[#allocation2 + $0x40] sm:$0xff]
    %v65 = vld [vmem:[#allocation2 + $0x48] sm:$0xff]
    %v66 = vld [vmem:[#allocation2 + $0x50] sm:$0xff]
    %v67 = vld [vmem:[#allocation2 + $0x58] sm:$0xff]
    %v68 = vld [vmem:[#allocation2 + $0x60] sm:$0xff]
    %v69 = vld [vmem:[#allocation2 + $0x68] sm:$0xff]
    %v70 = vld [vmem:[#allocation2 + $0x70] sm:$0xff]
    %v71 = vld [vmem:[#allocation2 + $0x78] sm:$0xff]
    %v72 = vld [vmem:[#allocation2 + $0x80] sm:$0xff]
    %v73 = vld [vmem:[#allocation2 + $0x88] sm:$0xff]
    %v74 = vld [vmem:[#allocation2 + $0x90] sm:$0xff]
    %v75 = vld [vmem:[#allocation2 + $0x98] sm:$0xff]
    %v76 = vld [vmem:[#allocation2 + $0xa0] sm:$0xff]
    %v77 = vld [vmem:[#allocation2 + $0xa8] sm:$0xff]
    %v78 = vld [vmem:[#allocation2 + $0xb0] sm:$0xff]
    %v79 = vld [vmem:[#allocation2 + $0xb8] sm:$0xff]
    %v80 = vld [vmem:[#allocation2 + $0xc0] sm:$0xff]
    %v81 = vld [vmem:[#allocation2 + $0xc8] sm:$0xff]
    %v82 = vld [vmem:[#allocation2 + $0xd0] sm:$0xff]
    %v83 = vld [vmem:[#allocation2 + $0xd8] sm:$0xff]
    %v84 = vld [vmem:[#allocation2 + $0xe0] sm:$0xff]
    %v85 = vld [vmem:[#allocation2 + $0xe8] sm:$0xff]
    %v86 = vld [vmem:[#allocation2 + $0xf0] sm:$0xff]
    %v87 = vld [vmem:[#allocation2 + $0xf8] sm:$0xff]
    %v88 = vld [vmem:[#allocation2 + $0x100] sm:$0x1f]
    %v89 = vld [vmem:[#allocation2 + $0x108] sm:$0x1f]
    %v90 = vld [vmem:[%s3] sm:$0x3]
    %v92 = vlaneseq
    %v93 = vshrl.u32 %v92, 7
    %v94 = vsub.s32 0, %v93
    %v95 = vrot.slane %v90, %v94
    %v96 = vlaneseq
    %v97 = vshrl.u32 %v96, 7
    %v98 = vsub.s32 1, %v97
    %v99 = vrot.slane %v90, %v98
    %vm102 = vcmask 39936
    %v104 = vsel %vm102, %v53, 0
    %v107 = vsel %vm102, %v55, 0
    %vm109 = vcmask 1044480
    %v111 = vsel %vm109, %v88, 0
    %v114 = vsel %vm109, %v89, 0
    %116 = vmatprep.subr.mxu0 %v57
    %117 = vmatpush1.msra.mxu0 %v56
    %118 = vmatprep.subr.mxu0 %v59
    %119 = vmatpush1.msra.mxu0 %v58
    %120 = vmatprep.subr.mxu0 %v61
    %121 = vmatpush1.msra.mxu0 %v60
    %122 = vmatprep.subr.mxu0 %v63
    %123 = vmatpush1.msra.mxu0 %v62
    %124 = vmatprep.subr.mxu0 %v65
    %125 = vmatpush1.msra.mxu0 %v64
    %126 = vmatprep.subr.mxu0 %v67
    %127 = vmatpush1.msra.mxu0 %v66
    %128 = vmatprep.subr.mxu0 %v69
    %129 = vmatpush1.msra.mxu0 %v68
    %130 = vmatprep.subr.mxu0 %v71
    %131 = vmatpush1.msra.mxu0 %v70
    %132 = vmatprep.subr.mxu0 %v73
    %133 = vmatpush1.msra.mxu0 %v72
    %134 = vmatprep.subr.mxu0 %v75
    %135 = vmatpush1.msra.mxu0 %v74
    %136 = vmatprep.subr.mxu0 %v77
    %137 = vmatpush1.msra.mxu0 %v76
    %138 = vmatprep.subr.mxu0 %v79
    %139 = vmatpush1.msra.mxu0 %v78
    %140 = vmatprep.subr.mxu0 %v81
    %141 = vmatpush1.msra.mxu0 %v80
    %142 = vmatprep.subr.mxu0 %v83
    %143 = vmatpush1.msra.mxu0 %v82
    %144 = vmatprep.subr.mxu0 %v85
    %145 = vmatpush1.msra.mxu0 %v84
    %146 = vmatprep.subr.mxu0 %v87
    %147 = vmatpush1.msra.mxu0 %v86
    %148 = vmatprep.subr.mxu0 %v114
    %149 = vmatpush1.msra.mxu0 %v111
    %150 = vmatprep.subr.mxu0 0.0
    %151 = vmatpush1.msra.mxu0 0.0
    %152 = vmatprep.subr.mxu0 0.0
    %153 = vmatpush1.msra.mxu0 0.0
    %154 = vmatprep.subr.mxu0 0.0
    %155 = vmatpush1.msra.mxu0 0.0
    %156 = vmatprep.subr.mxu0 0.0
    %157 = vmatpush1.msra.mxu0 0.0
    %158 = vmatprep.subr.mxu0 0.0
    %159 = vmatpush1.msra.mxu0 0.0
    %160 = vmatprep.subr.mxu0 0.0
    %161 = vmatpush1.msra.mxu0 0.0
    %162 = vmatprep.subr.mxu0 0.0
    %163 = vmatpush1.msra.mxu0 0.0
    %164 = vmatprep.subr.mxu0 0.0
    %165 = vmatpush1.msra.mxu0 0.0
    %166 = vmatprep.subr.mxu0 0.0
    %167 = vmatpush1.msra.mxu0 0.0
    %168 = vmatprep.subr.mxu0 0.0
    %169 = vmatpush1.msra.mxu0 0.0
    %170 = vmatprep.subr.mxu0 0.0
    %171 = vmatpush1.msra.mxu0 0.0
    %172 = vmatprep.subr.mxu0 0.0
    %173 = vmatpush1.msra.mxu0 0.0
    %174 = vmatprep.subr.mxu0 0.0
    %175 = vmatpush1.msra.mxu0 0.0
    %176 = vmatprep.subr.mxu0 0.0
    %177 = vmatpush1.msra.mxu0 0.0
    %178 = vmatprep.subr.mxu0 0.0
    %179 = vmatpush1.msra.mxu0 0.0
    %180 = vmatprep.mubr.f32.mxu0 %v104
    %181 = vmatmul.mubr.f32.gmra.mrb[0].mxu0 %v52
    %v182 = vpop.f32.mrb[0].mxu0
    %v183 = vadd.f32 %v95, %v182
    %v184 = vpop.f32.mrb[0].mxu0
    %v185 = vadd.f32 %v99, %v184
    %186 = vmatprep.mubr.f32.mxu0 %v107
    %187 = vmatmul.mubr.f32.gmra.mrb[0].mxu0 %v54
    %v188 = vpop.f32.mrb[0].mxu0
    %v189 = vadd.f32 %v95, %v188
    %v190 = vpop.f32.mrb[0].mxu0
    %v191 = vadd.f32 %v99, %v190
    %192 = vdwg.mxu0
    %v193 = vlaneseq
    %v194 = vand.u32 %v193, 127
    %v195 = vld [vmem:[%s2] sm:$0xff]
    %v196 = vld [vmem:[%s2 + $0x8] sm:$0xff]
    %v197 = vld [vmem:[%s2 + $0x10] sm:$0xff]
    %v198 = vld [vmem:[%s2 + $0x18] sm:$0xff]
    %v199 = vld [vmem:[%s2 + $0x20] sm:$0xff]
    %v200 = vld [vmem:[%s2 + $0x28] sm:$0xff]
    %v201 = vld [vmem:[%s2 + $0x30] sm:$0xff]
    %v202 = vld [vmem:[%s2 + $0x38] sm:$0xff]
    %v203 = vld [vmem:[%s2 + $0x40] sm:$0xff]
    %v204 = vld [vmem:[%s2 + $0x48] sm:$0xff]
    %v205 = vld [vmem:[%s2 + $0x50] sm:$0xff]
    %v206 = vld [vmem:[%s2 + $0x58] sm:$0xff]
    %v207 = vld [vmem:[%s2 + $0x60] sm:$0xff]
    %v208 = vld [vmem:[%s2 + $0x68] sm:$0xff]
    %v209 = vld [vmem:[%s2 + $0x70] sm:$0xff]
    %v210 = vld [vmem:[%s2 + $0x78] sm:$0xff]
    %vm211 = vcmask 523264
    %v213 = vsel %vm211, 0.0, 0
    %215 = vmatprep.subr.mxu0 %v196
    %216 = vmatpush1.msra.mxu0 %v195
    %217 = vmatprep.subr.mxu0 %v198
    %218 = vmatpush1.msra.mxu0 %v197
    %219 = vmatprep.subr.mxu0 %v200
    %220 = vmatpush1.msra.mxu0 %v199
    %221 = vmatprep.subr.mxu0 %v202
    %222 = vmatpush1.msra.mxu0 %v201
    %223 = vmatprep.subr.mxu0 %v204
    %224 = vmatpush1.msra.mxu0 %v203
    %225 = vmatprep.subr.mxu0 %v206
    %226 = vmatpush1.msra.mxu0 %v205
    %227 = vmatprep.subr.mxu0 %v208
    %228 = vmatpush1.msra.mxu0 %v207
    %229 = vmatprep.subr.mxu0 %v210
    %230 = vmatpush1.msra.mxu0 %v209
    %231 = vmatprep.subr.mxu0 0.0
    %232 = vmatpush1.msra.mxu0 0.0
    %233 = vmatprep.subr.mxu0 0.0
    %234 = vmatpush1.msra.mxu0 0.0
    %235 = vmatprep.subr.mxu0 0.0
    %236 = vmatpush1.msra.mxu0 0.0
    %237 = vmatprep.subr.mxu0 0.0
    %238 = vmatpush1.msra.mxu0 0.0
    %239 = vmatprep.subr.mxu0 0.0
    %240 = vmatpush1.msra.mxu0 0.0
    %241 = vmatprep.subr.mxu0 0.0
    %242 = vmatpush1.msra.mxu0 0.0
    %243 = vmatprep.subr.mxu0 0.0
    %244 = vmatpush1.msra.mxu0 0.0
    %245 = vmatprep.subr.mxu0 0.0
    %246 = vmatpush1.msra.mxu0 0.0
    %247 = vmatprep.subr.mxu0 0.0
    %248 = vmatpush1.msra.mxu0 0.0
    %249 = vmatprep.subr.mxu0 0.0
    %250 = vmatpush1.msra.mxu0 0.0
    %251 = vmatprep.subr.mxu0 0.0
    %252 = vmatpush1.msra.mxu0 0.0
    %253 = vmatprep.subr.mxu0 0.0
    %254 = vmatpush1.msra.mxu0 0.0
    %255 = vmatprep.subr.mxu0 0.0
    %256 = vmatpush1.msra.mxu0 0.0
    %257 = vmatprep.subr.mxu0 0.0
    %258 = vmatpush1.msra.mxu0 0.0
    %259 = vmatprep.subr.mxu0 0.0
    %260 = vmatpush1.msra.mxu0 0.0
    %261 = vmatprep.subr.mxu0 0.0
    %262 = vmatpush1.msra.mxu0 0.0
    %263 = vmatprep.subr.mxu0 0.0
    %264 = vmatpush1.msra.mxu0 0.0
    %265 = vmatprep.subr.mxu0 0.0
    %266 = vmatpush1.msra.mxu0 0.0
    %267 = vmatprep.subr.mxu0 0.0
    %268 = vmatpush1.msra.mxu0 0.0
    %269 = vmatprep.subr.mxu0 0.0
    %270 = vmatpush1.msra.mxu0 0.0
    %271 = vmatprep.subr.mxu0 0.0
    %272 = vmatpush1.msra.mxu0 0.0
    %273 = vmatprep.subr.mxu0 0.0
    %274 = vmatpush1.msra.mxu0 0.0
    %275 = vmatprep.subr.mxu0 0.0
    %276 = vmatpush1.msra.mxu0 0.0
    %277 = vmatprep.subr.mxu0 0.0
    %278 = vmatpush1.msra.mxu0 0.0
    %279 = vmatprep.mubr.f32.mxu0 0.0
    %280 = vmatmul.mubr.f32.gmra.mrb[0].mxu0 %v213
    %v281 = vpop.f32.mrb[0].mxu0
    %v282 = vadd.f32 0.0, %v281
    %v283 = vpop.f32.mrb[0].mxu0
    %v284 = vadd.f32 0.0, %v283
    %285 = vdwg.mxu0
    %v286 = vadd.f32 %v183, %v282
    %v287 = vadd.f32 %v185, %v284
    %v288 = vxor.u32 %v286, 2147483648
    %v289 = vmul.f32 %v288, 1.442695
    %v290 = vpow.pop %v289
    %v291 = vadd.f32 %v290, 1.0
    %v292 = vrcp.pop %v291
    %v293 = vmul.f32 1.0, %v292
    %vm294 = vcmp.lt.s32.totalorder %v194, 64
    %v295 = vxor.u32 %v287, 2147483648
    %v296 = vmul.f32 %v295, 1.442695
    %v297 = vpow.pop %v296
    %v298 = vadd.f32 %v297, 1.0
    %v299 = vrcp.pop %v298
    %v300 = vmul.f32 1.0, %v299
    %v301 = vtanh.pop %v287
    %v302 = vsel %vm294, %v300, %v301
    %v303 = vmul.f32 %v293, 0.0
    %305 = vrot.lane.b32.xlu0 %v302, 64
    %v306 = vpop.permute.xlu0 %305
    %v308 = vmul.f32 %v293, %v306
    %310 = vrot.lane.b32.xlu0 %v308, 64
    %v311 = vpop.permute.xlu0 %310
    %v313 = vadd.f32 %v303, %v311
    %v314 = vtanh.pop %v313
    %316 = vrot.lane.b32.xlu0 %v314, 64
    %v317 = vpop.permute.xlu0 %316
    %v319 = vmul.f32 %v302, %v317
    %v321 = vsel %vm211, %v319, 0
    %323 = vmatprep.subr.mxu0 %v196
    %324 = vmatpush1.msra.mxu0 %v195
    %325 = vmatprep.subr.mxu0 %v198
    %326 = vmatpush1.msra.mxu0 %v197
    %327 = vmatprep.subr.mxu0 %v200
    %328 = vmatpush1.msra.mxu0 %v199
    %329 = vmatprep.subr.mxu0 %v202
    %330 = vmatpush1.msra.mxu0 %v201
    %331 = vmatprep.subr.mxu0 %v204
    %332 = vmatpush1.msra.mxu0 %v203
    %333 = vmatprep.subr.mxu0 %v206
    %334 = vmatpush1.msra.mxu0 %v205
    %335 = vmatprep.subr.mxu0 %v208
    %336 = vmatpush1.msra.mxu0 %v207
    %337 = vmatprep.subr.mxu0 %v210
    %338 = vmatpush1.msra.mxu0 %v209
    %339 = vmatprep.subr.mxu0 0.0
    %340 = vmatpush1.msra.mxu0 0.0
    %341 = vmatprep.subr.mxu0 0.0
    %342 = vmatpush1.msra.mxu0 0.0
    %343 = vmatprep.subr.mxu0 0.0
    %344 = vmatpush1.msra.mxu0 0.0
    %345 = vmatprep.subr.mxu0 0.0
    %346 = vmatpush1.msra.mxu0 0.0
    %347 = vmatprep.subr.mxu0 0.0
    %348 = vmatpush1.msra.mxu0 0.0
    %349 = vmatprep.subr.mxu0 0.0
    %350 = vmatpush1.msra.mxu0 0.0
    %351 = vmatprep.subr.mxu0 0.0
    %352 = vmatpush1.msra.mxu0 0.0
    %353 = vmatprep.subr.mxu0 0.0
    %354 = vmatpush1.msra.mxu0 0.0
    %355 = vmatprep.subr.mxu0 0.0
    %356 = vmatpush1.msra.mxu0 0.0
    %357 = vmatprep.subr.mxu0 0.0
    %358 = vmatpush1.msra.mxu0 0.0
    %359 = vmatprep.subr.mxu0 0.0
    %360 = vmatpush1.msra.mxu0 0.0
    %361 = vmatprep.subr.mxu0 0.0
    %362 = vmatpush1.msra.mxu0 0.0
    %363 = vmatprep.subr.mxu0 0.0
    %364 = vmatpush1.msra.mxu0 0.0
    %365 = vmatprep.subr.mxu0 0.0
    %366 = vmatpush1.msra.mxu0 0.0
    %367 = vmatprep.subr.mxu0 0.0
    %368 = vmatpush1.msra.mxu0 0.0
    %369 = vmatprep.subr.mxu0 0.0
    %370 = vmatpush1.msra.mxu0 0.0
    %371 = vmatprep.subr.mxu0 0.0
    %372 = vmatpush1.msra.mxu0 0.0
    %373 = vmatprep.subr.mxu0 0.0
    %374 = vmatpush1.msra.mxu0 0.0
    %375 = vmatprep.subr.mxu0 0.0
    %376 = vmatpush1.msra.mxu0 0.0
    %377 = vmatprep.subr.mxu0 0.0
    %378 = vmatpush1.msra.mxu0 0.0
    %379 = vmatprep.subr.mxu0 0.0
    %380 = vmatpush1.msra.mxu0 0.0
    %381 = vmatprep.subr.mxu0 0.0
    %382 = vmatpush1.msra.mxu0 0.0
    %383 = vmatprep.subr.mxu0 0.0
    %384 = vmatpush1.msra.mxu0 0.0
    %385 = vmatprep.subr.mxu0 0.0
    %386 = vmatpush1.msra.mxu0 0.0
    %387 = vmatprep.mubr.f32.mxu0 0.0
    %388 = vmatmul.mubr.f32.gmra.mrb[0].mxu0 %v321
    %v389 = vpop.f32.mrb[0].mxu0
    %v390 = vadd.f32 0.0, %v389
    %v391 = vpop.f32.mrb[0].mxu0
    %v392 = vadd.f32 0.0, %v391
    %393 = vdwg.mxu0
    %v396 = vrot.slane %v390, 6
    %v397 = vrot.slane %v392, 6
    %v400 = vadd.f32 %v183, %v396
    %v401 = vadd.f32 %v185, %v397
    %v402 = vxor.u32 %v400, 2147483648
    %v403 = vmul.f32 %v402, 1.442695
    %v404 = vpow.pop %v403
    %v405 = vadd.f32 %v404, 1.0
    %v406 = vrcp.pop %v405
    %v407 = vmul.f32 1.0, %v406
    %v408 = vxor.u32 %v401, 2147483648
    %v409 = vmul.f32 %v408, 1.442695
    %v410 = vpow.pop %v409
    %v411 = vadd.f32 %v410, 1.0
    %v412 = vrcp.pop %v411
    %v413 = vmul.f32 1.0, %v412
    %v414 = vtanh.pop %v401
    %v415 = vsel %vm294, %v413, %v414
    %v417 = vrot.slane %v313, 6
    %v419 = vmul.f32 %v407, %v417
    %421 = vrot.lane.b32.xlu0 %v415, 64
    %v422 = vpop.permute.xlu0 %421
    %v424 = vmul.f32 %v407, %v422
    %426 = vrot.lane.b32.xlu0 %v424, 64
    %v427 = vpop.permute.xlu0 %426
    %v429 = vadd.f32 %v419, %v427
    %v430 = vtanh.pop %v429
    %432 = vrot.lane.b32.xlu0 %v430, 64
    %v433 = vpop.permute.xlu0 %432
    %v435 = vmul.f32 %v415, %v433
    %v437 = vrot.slane %v435, 2
    %v438 = vsel %vm211, %v437, 0
    %440 = vmatprep.subr.mxu0 %v196
    %441 = vmatpush1.msra.mxu0 %v195
    %442 = vmatprep.subr.mxu0 %v198
    %443 = vmatpush1.msra.mxu0 %v197
    %444 = vmatprep.subr.mxu0 %v200
    %445 = vmatpush1.msra.mxu0 %v199
    %446 = vmatprep.subr.mxu0 %v202
    %447 = vmatpush1.msra.mxu0 %v201
    %448 = vmatprep.subr.mxu0 %v204
    %449 = vmatpush1.msra.mxu0 %v203
    %450 = vmatprep.subr.mxu0 %v206
    %451 = vmatpush1.msra.mxu0 %v205
    %452 = vmatprep.subr.mxu0 %v208
    %453 = vmatpush1.msra.mxu0 %v207
    %454 = vmatprep.subr.mxu0 %v210
    %455 = vmatpush1.msra.mxu0 %v209
    %456 = vmatprep.subr.mxu0 0.0
    %457 = vmatpush1.msra.mxu0 0.0
    %458 = vmatprep.subr.mxu0 0.0
    %459 = vmatpush1.msra.mxu0 0.0
    %460 = vmatprep.subr.mxu0 0.0
    %461 = vmatpush1.msra.mxu0 0.0
    %462 = vmatprep.subr.mxu0 0.0
    %463 = vmatpush1.msra.mxu0 0.0
    %464 = vmatprep.subr.mxu0 0.0
    %465 = vmatpush1.msra.mxu0 0.0
    %466 = vmatprep.subr.mxu0 0.0
    %467 = vmatpush1.msra.mxu0 0.0
    %468 = vmatprep.subr.mxu0 0.0
    %469 = vmatpush1.msra.mxu0 0.0
    %470 = vmatprep.subr.mxu0 0.0
    %471 = vmatpush1.msra.mxu0 0.0
    %472 = vmatprep.subr.mxu0 0.0
    %473 = vmatpush1.msra.mxu0 0.0
    %474 = vmatprep.subr.mxu0 0.0
    %475 = vmatpush1.msra.mxu0 0.0
    %476 = vmatprep.subr.mxu0 0.0
    %477 = vmatpush1.msra.mxu0 0.0
    %478 = vmatprep.subr.mxu0 0.0
    %479 = vmatpush1.msra.mxu0 0.0
    %480 = vmatprep.subr.mxu0 0.0
    %481 = vmatpush1.msra.mxu0 0.0
    %482 = vmatprep.subr.mxu0 0.0
    %483 = vmatpush1.msra.mxu0 0.0
    %484 = vmatprep.subr.mxu0 0.0
    %485 = vmatpush1.msra.mxu0 0.0
    %486 = vmatprep.subr.mxu0 0.0
    %487 = vmatpush1.msra.mxu0 0.0
    %488 = vmatprep.subr.mxu0 0.0
    %489 = vmatpush1.msra.mxu0 0.0
    %490 = vmatprep.subr.mxu0 0.0
    %491 = vmatpush1.msra.mxu0 0.0
    %492 = vmatprep.subr.mxu0 0.0
    %493 = vmatpush1.msra.mxu0 0.0
    %494 = vmatprep.subr.mxu0 0.0
    %495 = vmatpush1.msra.mxu0 0.0
    %496 = vmatprep.subr.mxu0 0.0
    %497 = vmatpush1.msra.mxu0 0.0
    %498 = vmatprep.subr.mxu0 0.0
    %499 = vmatpush1.msra.mxu0 0.0
    %500 = vmatprep.subr.mxu0 0.0
    %501 = vmatpush1.msra.mxu0 0.0
    %502 = vmatprep.subr.mxu0 0.0
    %503 = vmatpush1.msra.mxu0 0.0
    %504 = vmatprep.mubr.f32.mxu0 0.0
    %505 = vmatmul.mubr.f32.gmra.mrb[0].mxu0 %v438
    %v506 = vpop.f32.mrb[0].mxu0
    %v507 = vadd.f32 0.0, %v506
    %v508 = vpop.f32.mrb[0].mxu0
    %v509 = vadd.f32 0.0, %v508
    %510 = vdwg.mxu0
    %v513 = vrot.slane %v507, 4
    %v514 = vrot.slane %v509, 4
    %v517 = vadd.f32 %v183, %v513
    %v518 = vadd.f32 %v185, %v514
    %v519 = vxor.u32 %v517, 2147483648
    %v520 = vmul.f32 %v519, 1.442695
    %v521 = vpow.pop %v520
    %v522 = vadd.f32 %v521, 1.0
    %v523 = vrcp.pop %v522
    %v524 = vmul.f32 1.0, %v523
    %v525 = vxor.u32 %v518, 2147483648
    %v526 = vmul.f32 %v525, 1.442695
    %v527 = vpow.pop %v526
    %v528 = vadd.f32 %v527, 1.0
    %v529 = vrcp.pop %v528
    %v530 = vmul.f32 1.0, %v529
    %v531 = vtanh.pop %v518
    %v532 = vsel %vm294, %v530, %v531
    %v534 = vrot.slane %v429, 6
    %v536 = vmul.f32 %v524, %v534
    %538 = vrot.lane.b32.xlu0 %v532, 64
    %v539 = vpop.permute.xlu0 %538
    %v541 = vmul.f32 %v524, %v539
    %543 = vrot.lane.b32.xlu0 %v541, 64
    %v544 = vpop.permute.xlu0 %543
    %v546 = vadd.f32 %v536, %v544
    %v547 = vtanh.pop %v546
    %549 = vrot.lane.b32.xlu0 %v547, 64
    %v550 = vpop.permute.xlu0 %549
    %v552 = vmul.f32 %v532, %v550
    %v554 = vrot.slane %v552, 4
    %v555 = vsel %vm211, %v554, 0
    %557 = vmatprep.subr.mxu0 %v196
    %558 = vmatpush1.msra.mxu0 %v195
    %559 = vmatprep.subr.mxu0 %v198
    %560 = vmatpush1.msra.mxu0 %v197
    %561 = vmatprep.subr.mxu0 %v200
    %562 = vmatpush1.msra.mxu0 %v199
    %563 = vmatprep.subr.mxu0 %v202
    %564 = vmatpush1.msra.mxu0 %v201
    %565 = vmatprep.subr.mxu0 %v204
    %566 = vmatpush1.msra.mxu0 %v203
    %567 = vmatprep.subr.mxu0 %v206
    %568 = vmatpush1.msra.mxu0 %v205
    %569 = vmatprep.subr.mxu0 %v208
    %570 = vmatpush1.msra.mxu0 %v207
    %571 = vmatprep.subr.mxu0 %v210
    %572 = vmatpush1.msra.mxu0 %v209
    %573 = vmatprep.subr.mxu0 0.0
    %574 = vmatpush1.msra.mxu0 0.0
    %575 = vmatprep.subr.mxu0 0.0
    %576 = vmatpush1.msra.mxu0 0.0
    %577 = vmatprep.subr.mxu0 0.0
    %578 = vmatpush1.msra.mxu0 0.0
    %579 = vmatprep.subr.mxu0 0.0
    %580 = vmatpush1.msra.mxu0 0.0
    %581 = vmatprep.subr.mxu0 0.0
    %582 = vmatpush1.msra.mxu0 0.0
    %583 = vmatprep.subr.mxu0 0.0
    %584 = vmatpush1.msra.mxu0 0.0
    %585 = vmatprep.subr.mxu0 0.0
    %586 = vmatpush1.msra.mxu0 0.0
    %587 = vmatprep.subr.mxu0 0.0
    %588 = vmatpush1.msra.mxu0 0.0
    %589 = vmatprep.subr.mxu0 0.0
    %590 = vmatpush1.msra.mxu0 0.0
    %591 = vmatprep.subr.mxu0 0.0
    %592 = vmatpush1.msra.mxu0 0.0
    %593 = vmatprep.subr.mxu0 0.0
    %594 = vmatpush1.msra.mxu0 0.0
    %595 = vmatprep.subr.mxu0 0.0
    %596 = vmatpush1.msra.mxu0 0.0
    %597 = vmatprep.subr.mxu0 0.0
    %598 = vmatpush1.msra.mxu0 0.0
    %599 = vmatprep.subr.mxu0 0.0
    %600 = vmatpush1.msra.mxu0 0.0
    %601 = vmatprep.subr.mxu0 0.0
    %602 = vmatpush1.msra.mxu0 0.0
    %603 = vmatprep.subr.mxu0 0.0
    %604 = vmatpush1.msra.mxu0 0.0
    %605 = vmatprep.subr.mxu0 0.0
    %606 = vmatpush1.msra.mxu0 0.0
    %607 = vmatprep.subr.mxu0 0.0
    %608 = vmatpush1.msra.mxu0 0.0
    %609 = vmatprep.subr.mxu0 0.0
    %610 = vmatpush1.msra.mxu0 0.0
    %611 = vmatprep.subr.mxu0 0.0
    %612 = vmatpush1.msra.mxu0 0.0
    %613 = vmatprep.subr.mxu0 0.0
    %614 = vmatpush1.msra.mxu0 0.0
    %615 = vmatprep.subr.mxu0 0.0
    %616 = vmatpush1.msra.mxu0 0.0
    %617 = vmatprep.subr.mxu0 0.0
    %618 = vmatpush1.msra.mxu0 0.0
    %619 = vmatprep.subr.mxu0 0.0
    %620 = vmatpush1.msra.mxu0 0.0
    %621 = vmatprep.mubr.f32.mxu0 0.0
    %622 = vmatmul.mubr.f32.gmra.mrb[0].mxu0 %v555
    %v623 = vpop.f32.mrb[0].mxu0
    %v624 = vadd.f32 0.0, %v623
    %v625 = vpop.f32.mrb[0].mxu0
    %v626 = vadd.f32 0.0, %v625
    %627 = vdwg.mxu0
    %v630 = vrot.slane %v624, 2
    %v631 = vrot.slane %v626, 2
    %v634 = vadd.f32 %v183, %v630
    %v635 = vadd.f32 %v185, %v631
    %v636 = vxor.u32 %v634, 2147483648
    %v637 = vmul.f32 %v636, 1.442695
    %v638 = vpow.pop %v637
    %v639 = vadd.f32 %v638, 1.0
    %v640 = vrcp.pop %v639
    %v641 = vmul.f32 1.0, %v640
    %v642 = vxor.u32 %v635, 2147483648
    %v643 = vmul.f32 %v642, 1.442695
    %v644 = vpow.pop %v643
    %v645 = vadd.f32 %v644, 1.0
    %v646 = vrcp.pop %v645
    %v647 = vmul.f32 1.0, %v646
    %v648 = vtanh.pop %v635
    %v649 = vsel %vm294, %v647, %v648
    %v651 = vrot.slane %v546, 6
    %v653 = vmul.f32 %v641, %v651
    %655 = vrot.lane.b32.xlu0 %v649, 64
    %v656 = vpop.permute.xlu0 %655
    %v658 = vmul.f32 %v641, %v656
    %660 = vrot.lane.b32.xlu0 %v658, 64
    %v661 = vpop.permute.xlu0 %660
    %v663 = vadd.f32 %v653, %v661
    %v664 = vtanh.pop %v663
    %666 = vrot.lane.b32.xlu0 %v664, 64
    %v667 = vpop.permute.xlu0 %666
    %v669 = vmul.f32 %v649, %v667
    %v671 = vrot.slane %v669, 6
    %v672 = vsel %vm211, %v671, 0
    %674 = vmatprep.subr.mxu0 %v196
    %675 = vmatpush1.msra.mxu0 %v195
    %676 = vmatprep.subr.mxu0 %v198
    %677 = vmatpush1.msra.mxu0 %v197
    %678 = vmatprep.subr.mxu0 %v200
    %679 = vmatpush1.msra.mxu0 %v199
    %680 = vmatprep.subr.mxu0 %v202
    %681 = vmatpush1.msra.mxu0 %v201
    %682 = vmatprep.subr.mxu0 %v204
    %683 = vmatpush1.msra.mxu0 %v203
    %684 = vmatprep.subr.mxu0 %v206
    %685 = vmatpush1.msra.mxu0 %v205
    %686 = vmatprep.subr.mxu0 %v208
    %687 = vmatpush1.msra.mxu0 %v207
    %688 = vmatprep.subr.mxu0 %v210
    %689 = vmatpush1.msra.mxu0 %v209
    %690 = vmatprep.subr.mxu0 0.0
    %691 = vmatpush1.msra.mxu0 0.0
    %692 = vmatprep.subr.mxu0 0.0
    %693 = vmatpush1.msra.mxu0 0.0
    %694 = vmatprep.subr.mxu0 0.0
    %695 = vmatpush1.msra.mxu0 0.0
    %696 = vmatprep.subr.mxu0 0.0
    %697 = vmatpush1.msra.mxu0 0.0
    %698 = vmatprep.subr.mxu0 0.0
    %699 = vmatpush1.msra.mxu0 0.0
    %700 = vmatprep.subr.mxu0 0.0
    %701 = vmatpush1.msra.mxu0 0.0
    %702 = vmatprep.subr.mxu0 0.0
    %703 = vmatpush1.msra.mxu0 0.0
    %704 = vmatprep.subr.mxu0 0.0
    %705 = vmatpush1.msra.mxu0 0.0
    %706 = vmatprep.subr.mxu0 0.0
    %707 = vmatpush1.msra.mxu0 0.0
    %708 = vmatprep.subr.mxu0 0.0
    %709 = vmatpush1.msra.mxu0 0.0
    %710 = vmatprep.subr.mxu0 0.0
    %711 = vmatpush1.msra.mxu0 0.0
    %712 = vmatprep.subr.mxu0 0.0
    %713 = vmatpush1.msra.mxu0 0.0
    %714 = vmatprep.subr.mxu0 0.0
    %715 = vmatpush1.msra.mxu0 0.0
    %716 = vmatprep.subr.mxu0 0.0
    %717 = vmatpush1.msra.mxu0 0.0
    %718 = vmatprep.subr.mxu0 0.0
    %719 = vmatpush1.msra.mxu0 0.0
    %720 = vmatprep.subr.mxu0 0.0
    %721 = vmatpush1.msra.mxu0 0.0
    %722 = vmatprep.subr.mxu0 0.0
    %723 = vmatpush1.msra.mxu0 0.0
    %724 = vmatprep.subr.mxu0 0.0
    %725 = vmatpush1.msra.mxu0 0.0
    %726 = vmatprep.subr.mxu0 0.0
    %727 = vmatpush1.msra.mxu0 0.0
    %728 = vmatprep.subr.mxu0 0.0
    %729 = vmatpush1.msra.mxu0 0.0
    %730 = vmatprep.subr.mxu0 0.0
    %731 = vmatpush1.msra.mxu0 0.0
    %732 = vmatprep.subr.mxu0 0.0
    %733 = vmatpush1.msra.mxu0 0.0
    %734 = vmatprep.subr.mxu0 0.0
    %735 = vmatpush1.msra.mxu0 0.0
    %736 = vmatprep.subr.mxu0 0.0
    %737 = vmatpush1.msra.mxu0 0.0
    %738 = vmatprep.mubr.f32.mxu0 0.0
    %739 = vmatmul.mubr.f32.gmra.mrb[0].mxu0 %v672
    %v740 = vpop.f32.mrb[0].mxu0
    %v741 = vadd.f32 0.0, %v740
    %v742 = vpop.f32.mrb[0].mxu0
    %v743 = vadd.f32 0.0, %v742
    %744 = vdwg.mxu0
    %v745 = vadd.f32 %v189, %v741
    %v746 = vadd.f32 %v191, %v743
    %v747 = vxor.u32 %v745, 2147483648
    %v748 = vmul.f32 %v747, 1.442695
    %v749 = vpow.pop %v748
    %v750 = vadd.f32 %v749, 1.0
    %v751 = vrcp.pop %v750
    %v752 = vmul.f32 1.0, %v751
    %v753 = vxor.u32 %v746, 2147483648
    %v754 = vmul.f32 %v753, 1.442695
    %v755 = vpow.pop %v754
    %v756 = vadd.f32 %v755, 1.0
    %v757 = vrcp.pop %v756
    %v758 = vmul.f32 1.0, %v757
    %v759 = vtanh.pop %v746
    %v760 = vsel %vm294, %v758, %v759
    %v762 = vrot.slane %v663, 6
    %v764 = vmul.f32 %v752, %v762
    %766 = vrot.lane.b32.xlu0 %v760, 64
    %v767 = vpop.permute.xlu0 %766
    %v769 = vmul.f32 %v752, %v767
    %771 = vrot.lane.b32.xlu0 %v769, 64
    %v772 = vpop.permute.xlu0 %771
    %v774 = vadd.f32 %v764, %v772
    %v775 = vtanh.pop %v774
    %777 = vrot.lane.b32.xlu0 %v775, 64
    %v778 = vpop.permute.xlu0 %777
    %v780 = vmul.f32 %v760, %v778
    %v782 = vsel %vm211, %v780, 0
    %784 = vmatprep.subr.mxu0 %v196
    %785 = vmatpush1.msra.mxu0 %v195
    %786 = vmatprep.subr.mxu0 %v198
    %787 = vmatpush1.msra.mxu0 %v197
    %788 = vmatprep.subr.mxu0 %v200
    %789 = vmatpush1.msra.mxu0 %v199
    %790 = vmatprep.subr.mxu0 %v202
    %791 = vmatpush1.msra.mxu0 %v201
    %792 = vmatprep.subr.mxu0 %v204
    %793 = vmatpush1.msra.mxu0 %v203
    %794 = vmatprep.subr.mxu0 %v206
    %795 = vmatpush1.msra.mxu0 %v205
    %796 = vmatprep.subr.mxu0 %v208
    %797 = vmatpush1.msra.mxu0 %v207
    %798 = vmatprep.subr.mxu0 %v210
    %799 = vmatpush1.msra.mxu0 %v209
    %800 = vmatprep.subr.mxu0 0.0
    %801 = vmatpush1.msra.mxu0 0.0
    %802 = vmatprep.subr.mxu0 0.0
    %803 = vmatpush1.msra.mxu0 0.0
    %804 = vmatprep.subr.mxu0 0.0
    %805 = vmatpush1.msra.mxu0 0.0
    %806 = vmatprep.subr.mxu0 0.0
    %807 = vmatpush1.msra.mxu0 0.0
    %808 = vmatprep.subr.mxu0 0.0
    %809 = vmatpush1.msra.mxu0 0.0
    %810 = vmatprep.subr.mxu0 0.0
    %811 = vmatpush1.msra.mxu0 0.0
    %812 = vmatprep.subr.mxu0 0.0
    %813 = vmatpush1.msra.mxu0 0.0
    %814 = vmatprep.subr.mxu0 0.0
    %815 = vmatpush1.msra.mxu0 0.0
    %816 = vmatprep.subr.mxu0 0.0
    %817 = vmatpush1.msra.mxu0 0.0
    %818 = vmatprep.subr.mxu0 0.0
    %819 = vmatpush1.msra.mxu0 0.0
    %820 = vmatprep.subr.mxu0 0.0
    %821 = vmatpush1.msra.mxu0 0.0
    %822 = vmatprep.subr.mxu0 0.0
    %823 = vmatpush1.msra.mxu0 0.0
    %824 = vmatprep.subr.mxu0 0.0
    %825 = vmatpush1.msra.mxu0 0.0
    %826 = vmatprep.subr.mxu0 0.0
    %827 = vmatpush1.msra.mxu0 0.0
    %828 = vmatprep.subr.mxu0 0.0
    %829 = vmatpush1.msra.mxu0 0.0
    %830 = vmatprep.subr.mxu0 0.0
    %831 = vmatpush1.msra.mxu0 0.0
    %832 = vmatprep.subr.mxu0 0.0
    %833 = vmatpush1.msra.mxu0 0.0
    %834 = vmatprep.subr.mxu0 0.0
    %835 = vmatpush1.msra.mxu0 0.0
    %836 = vmatprep.subr.mxu0 0.0
    %837 = vmatpush1.msra.mxu0 0.0
    %838 = vmatprep.subr.mxu0 0.0
    %839 = vmatpush1.msra.mxu0 0.0
    %840 = vmatprep.subr.mxu0 0.0
    %841 = vmatpush1.msra.mxu0 0.0
    %842 = vmatprep.subr.mxu0 0.0
    %843 = vmatpush1.msra.mxu0 0.0
    %844 = vmatprep.subr.mxu0 0.0
    %845 = vmatpush1.msra.mxu0 0.0
    %846 = vmatprep.subr.mxu0 0.0
    %847 = vmatpush1.msra.mxu0 0.0
    %848 = vmatprep.mubr.f32.mxu0 0.0
    %849 = vmatmul.mubr.f32.gmra.mrb[0].mxu0 %v782
    %v850 = vpop.f32.mrb[0].mxu0
    %v851 = vadd.f32 0.0, %v850
    %v852 = vpop.f32.mrb[0].mxu0
    %v853 = vadd.f32 0.0, %v852
    %854 = vdwg.mxu0
    %v857 = vrot.slane %v851, 6
    %v858 = vrot.slane %v853, 6
    %v861 = vadd.f32 %v189, %v857
    %v862 = vadd.f32 %v191, %v858
    %v863 = vxor.u32 %v861, 2147483648
    %v864 = vmul.f32 %v863, 1.442695
    %v865 = vpow.pop %v864
    %v866 = vadd.f32 %v865, 1.0
    %v867 = vrcp.pop %v866
    %v868 = vmul.f32 1.0, %v867
    %v869 = vxor.u32 %v862, 2147483648
    %v870 = vmul.f32 %v869, 1.442695
    %v871 = vpow.pop %v870
    %v872 = vadd.f32 %v871, 1.0
    %v873 = vrcp.pop %v872
    %v874 = vmul.f32 1.0, %v873
    %v875 = vtanh.pop %v862
    %v876 = vsel %vm294, %v874, %v875
    %v878 = vrot.slane %v774, 6
    %v880 = vmul.f32 %v868, %v878
    %882 = vrot.lane.b32.xlu0 %v876, 64
    %v883 = vpop.permute.xlu0 %882
    %v885 = vmul.f32 %v868, %v883
    %887 = vrot.lane.b32.xlu0 %v885, 64
    %v888 = vpop.permute.xlu0 %887
    %v890 = vadd.f32 %v880, %v888
    %v891 = vtanh.pop %v890
    %893 = vrot.lane.b32.xlu0 %v891, 64
    %v894 = vpop.permute.xlu0 %893
    %v896 = vmul.f32 %v876, %v894
    %v898 = vrot.slane %v896, 2
    %v899 = vsel %vm211, %v898, 0
    %901 = vmatprep.subr.mxu0 %v196
    %902 = vmatpush1.msra.mxu0 %v195
    %903 = vmatprep.subr.mxu0 %v198
    %904 = vmatpush1.msra.mxu0 %v197
    %905 = vmatprep.subr.mxu0 %v200
    %906 = vmatpush1.msra.mxu0 %v199
    %907 = vmatprep.subr.mxu0 %v202
    %908 = vmatpush1.msra.mxu0 %v201
    %909 = vmatprep.subr.mxu0 %v204
    %910 = vmatpush1.msra.mxu0 %v203
    %911 = vmatprep.subr.mxu0 %v206
    %912 = vmatpush1.msra.mxu0 %v205
    %913 = vmatprep.subr.mxu0 %v208
    %914 = vmatpush1.msra.mxu0 %v207
    %915 = vmatprep.subr.mxu0 %v210
    %916 = vmatpush1.msra.mxu0 %v209
    %917 = vmatprep.subr.mxu0 0.0
    %918 = vmatpush1.msra.mxu0 0.0
    %919 = vmatprep.subr.mxu0 0.0
    %920 = vmatpush1.msra.mxu0 0.0
    %921 = vmatprep.subr.mxu0 0.0
    %922 = vmatpush1.msra.mxu0 0.0
    %923 = vmatprep.subr.mxu0 0.0
    %924 = vmatpush1.msra.mxu0 0.0
    %925 = vmatprep.subr.mxu0 0.0
    %926 = vmatpush1.msra.mxu0 0.0
    %927 = vmatprep.subr.mxu0 0.0
    %928 = vmatpush1.msra.mxu0 0.0
    %929 = vmatprep.subr.mxu0 0.0
    %930 = vmatpush1.msra.mxu0 0.0
    %931 = vmatprep.subr.mxu0 0.0
    %932 = vmatpush1.msra.mxu0 0.0
    %933 = vmatprep.subr.mxu0 0.0
    %934 = vmatpush1.msra.mxu0 0.0
    %935 = vmatprep.subr.mxu0 0.0
    %936 = vmatpush1.msra.mxu0 0.0
    %937 = vmatprep.subr.mxu0 0.0
    %938 = vmatpush1.msra.mxu0 0.0
    %939 = vmatprep.subr.mxu0 0.0
    %940 = vmatpush1.msra.mxu0 0.0
    %941 = vmatprep.subr.mxu0 0.0
    %942 = vmatpush1.msra.mxu0 0.0
    %943 = vmatprep.subr.mxu0 0.0
    %944 = vmatpush1.msra.mxu0 0.0
    %945 = vmatprep.subr.mxu0 0.0
    %946 = vmatpush1.msra.mxu0 0.0
    %947 = vmatprep.subr.mxu0 0.0
    %948 = vmatpush1.msra.mxu0 0.0
    %949 = vmatprep.subr.mxu0 0.0
    %950 = vmatpush1.msra.mxu0 0.0
    %951 = vmatprep.subr.mxu0 0.0
    %952 = vmatpush1.msra.mxu0 0.0
    %953 = vmatprep.subr.mxu0 0.0
    %954 = vmatpush1.msra.mxu0 0.0
    %955 = vmatprep.subr.mxu0 0.0
    %956 = vmatpush1.msra.mxu0 0.0
    %957 = vmatprep.subr.mxu0 0.0
    %958 = vmatpush1.msra.mxu0 0.0
    %959 = vmatprep.subr.mxu0 0.0
    %960 = vmatpush1.msra.mxu0 0.0
    %961 = vmatprep.subr.mxu0 0.0
    %962 = vmatpush1.msra.mxu0 0.0
    %963 = vmatprep.subr.mxu0 0.0
    %964 = vmatpush1.msra.mxu0 0.0
    %965 = vmatprep.mubr.f32.mxu0 0.0
    %966 = vmatmul.mubr.f32.gmra.mrb[0].mxu0 %v899
    %v967 = vpop.f32.mrb[0].mxu0
    %v968 = vadd.f32 0.0, %v967
    %v969 = vpop.f32.mrb[0].mxu0
    %v970 = vadd.f32 0.0, %v969
    %971 = vdwg.mxu0
    %v974 = vrot.slane %v968, 4
    %v975 = vrot.slane %v970, 4
    %v978 = vadd.f32 %v189, %v974
    %v979 = vadd.f32 %v191, %v975
    %v980 = vxor.u32 %v978, 2147483648
    %v981 = vmul.f32 %v980, 1.442695
    %v982 = vpow.pop %v981
    %v983 = vadd.f32 %v982, 1.0
    %v984 = vrcp.pop %v983
    %v985 = vmul.f32 1.0, %v984
    %v986 = vxor.u32 %v979, 2147483648
    %v987 = vmul.f32 %v986, 1.442695
    %v988 = vpow.pop %v987
    %v989 = vadd.f32 %v988, 1.0
    %v990 = vrcp.pop %v989
    %v991 = vmul.f32 1.0, %v990
    %v992 = vtanh.pop %v979
    %v993 = vsel %vm294, %v991, %v992
    %v995 = vrot.slane %v890, 6
    %v997 = vmul.f32 %v985, %v995
    %999 = vrot.lane.b32.xlu0 %v993, 64
    %v1000 = vpop.permute.xlu0 %999
    %v1002 = vmul.f32 %v985, %v1000
    %1004 = vrot.lane.b32.xlu0 %v1002, 64
    %v1005 = vpop.permute.xlu0 %1004
    %v1007 = vadd.f32 %v997, %v1005
    %v1008 = vtanh.pop %v1007
    %1010 = vrot.lane.b32.xlu0 %v1008, 64
    %v1011 = vpop.permute.xlu0 %1010
    %v1013 = vmul.f32 %v993, %v1011
    %v1015 = vrot.slane %v1013, 4
    %v1016 = vsel %vm211, %v1015, 0
    %1018 = vmatprep.subr.mxu0 %v196
    %1019 = vmatpush1.msra.mxu0 %v195
    %1020 = vmatprep.subr.mxu0 %v198
    %1021 = vmatpush1.msra.mxu0 %v197
    %1022 = vmatprep.subr.mxu0 %v200
    %1023 = vmatpush1.msra.mxu0 %v199
    %1024 = vmatprep.subr.mxu0 %v202
    %1025 = vmatpush1.msra.mxu0 %v201
    %1026 = vmatprep.subr.mxu0 %v204
    %1027 = vmatpush1.msra.mxu0 %v203
    %1028 = vmatprep.subr.mxu0 %v206
    %1029 = vmatpush1.msra.mxu0 %v205
    %1030 = vmatprep.subr.mxu0 %v208
    %1031 = vmatpush1.msra.mxu0 %v207
    %1032 = vmatprep.subr.mxu0 %v210
    %1033 = vmatpush1.msra.mxu0 %v209
    %1034 = vmatprep.subr.mxu0 0.0
    %1035 = vmatpush1.msra.mxu0 0.0
    %1036 = vmatprep.subr.mxu0 0.0
    %1037 = vmatpush1.msra.mxu0 0.0
    %1038 = vmatprep.subr.mxu0 0.0
    %1039 = vmatpush1.msra.mxu0 0.0
    %1040 = vmatprep.subr.mxu0 0.0
    %1041 = vmatpush1.msra.mxu0 0.0
    %1042 = vmatprep.subr.mxu0 0.0
    %1043 = vmatpush1.msra.mxu0 0.0
    %1044 = vmatprep.subr.mxu0 0.0
    %1045 = vmatpush1.msra.mxu0 0.0
    %1046 = vmatprep.subr.mxu0 0.0
    %1047 = vmatpush1.msra.mxu0 0.0
    %1048 = vmatprep.subr.mxu0 0.0
    %1049 = vmatpush1.msra.mxu0 0.0
    %1050 = vmatprep.subr.mxu0 0.0
    %1051 = vmatpush1.msra.mxu0 0.0
    %1052 = vmatprep.subr.mxu0 0.0
    %1053 = vmatpush1.msra.mxu0 0.0
    %1054 = vmatprep.subr.mxu0 0.0
    %1055 = vmatpush1.msra.mxu0 0.0
    %1056 = vmatprep.subr.mxu0 0.0
    %1057 = vmatpush1.msra.mxu0 0.0
    %1058 = vmatprep.subr.mxu0 0.0
    %1059 = vmatpush1.msra.mxu0 0.0
    %1060 = vmatprep.subr.mxu0 0.0
    %1061 = vmatpush1.msra.mxu0 0.0
    %1062 = vmatprep.subr.mxu0 0.0
    %1063 = vmatpush1.msra.mxu0 0.0
    %1064 = vmatprep.subr.mxu0 0.0
    %1065 = vmatpush1.msra.mxu0 0.0
    %1066 = vmatprep.subr.mxu0 0.0
    %1067 = vmatpush1.msra.mxu0 0.0
    %1068 = vmatprep.subr.mxu0 0.0
    %1069 = vmatpush1.msra.mxu0 0.0
    %1070 = vmatprep.subr.mxu0 0.0
    %1071 = vmatpush1.msra.mxu0 0.0
    %1072 = vmatprep.subr.mxu0 0.0
    %1073 = vmatpush1.msra.mxu0 0.0
    %1074 = vmatprep.subr.mxu0 0.0
    %1075 = vmatpush1.msra.mxu0 0.0
    %1076 = vmatprep.subr.mxu0 0.0
    %1077 = vmatpush1.msra.mxu0 0.0
    %1078 = vmatprep.subr.mxu0 0.0
    %1079 = vmatpush1.msra.mxu0 0.0
    %1080 = vmatprep.subr.mxu0 0.0
    %1081 = vmatpush1.msra.mxu0 0.0
    %1082 = vmatprep.mubr.f32.mxu0 0.0
    %1083 = vmatmul.mubr.f32.gmra.mrb[0].mxu0 %v1016
    %v1084 = vpop.f32.mrb[0].mxu0
    %v1085 = vadd.f32 0.0, %v1084
    %v1086 = vpop.f32.mrb[0].mxu0
    %v1087 = vadd.f32 0.0, %v1086
    %1088 = vdwg.mxu0
    %v1091 = vrot.slane %v1085, 2
    %v1092 = vrot.slane %v1087, 2
    %v1095 = vadd.f32 %v189, %v1091
    %v1096 = vadd.f32 %v191, %v1092
    %v1097 = vxor.u32 %v1095, 2147483648
    %v1098 = vmul.f32 %v1097, 1.442695
    %v1099 = vpow.pop %v1098
    %v1100 = vadd.f32 %v1099, 1.0
    %v1101 = vrcp.pop %v1100
    %v1102 = vmul.f32 1.0, %v1101
    %v1103 = vxor.u32 %v1096, 2147483648
    %v1104 = vmul.f32 %v1103, 1.442695
    %v1105 = vpow.pop %v1104
    %v1106 = vadd.f32 %v1105, 1.0
    %v1107 = vrcp.pop %v1106
    %v1108 = vmul.f32 1.0, %v1107
    %v1109 = vtanh.pop %v1096
    %v1110 = vsel %vm294, %v1108, %v1109
    %v1112 = vrot.slane %v1007, 6
    %v1114 = vmul.f32 %v1102, %v1112
    %1116 = vrot.lane.b32.xlu0 %v1110, 64
    %v1117 = vpop.permute.xlu0 %1116
    %v1119 = vmul.f32 %v1102, %v1117
    %1121 = vrot.lane.b32.xlu0 %v1119, 64
    %v1122 = vpop.permute.xlu0 %1121
    %v1124 = vadd.f32 %v1114, %v1122
    %v1125 = vtanh.pop %v1124
    %1127 = vrot.lane.b32.xlu0 %v1125, 64
    %v1128 = vpop.permute.xlu0 %1127
    %v1130 = vmul.f32 %v1110, %v1128
    %v1131 = vld [vmem:[#allocation5] sm:$0xff]
    %v1132 = vld [vmem:[#allocation5 + $0x8] sm:$0xff]
    %v1133 = vld [vmem:[#allocation5 + $0x10] sm:$0xff]
    %v1134 = vld [vmem:[#allocation5 + $0x18] sm:$0xff]
    %v1135 = vld [vmem:[#allocation5 + $0x20] sm:$0xff]
    %v1136 = vld [vmem:[#allocation5 + $0x28] sm:$0xff]
    %v1137 = vld [vmem:[#allocation5 + $0x30] sm:$0xff]
    %v1138 = vld [vmem:[#allocation5 + $0x38] sm:$0xff]
    %v1139 = vld [vmem:[%s5] sm:$0x1]
    %v1141 = vlaneseq
    %v1142 = vshrl.u32 %v1141, 7
    %v1143 = vsub.s32 0, %v1142
    %v1144 = vrot.slane %v1139, %v1143
    %v1147 = vrot.slane %v1130, 6
    %v1148 = vsel %vm211, %v1147, 0
    %1150 = vmatprep.subr.mxu0 0.0
    %1151 = vmatpush1.msra.mxu0 %v1131
    %1152 = vmatprep.subr.mxu0 0.0
    %1153 = vmatpush1.msra.mxu0 %v1132
    %1154 = vmatprep.subr.mxu0 0.0
    %1155 = vmatpush1.msra.mxu0 %v1133
    %1156 = vmatprep.subr.mxu0 0.0
    %1157 = vmatpush1.msra.mxu0 %v1134
    %1158 = vmatprep.subr.mxu0 0.0
    %1159 = vmatpush1.msra.mxu0 %v1135
    %1160 = vmatprep.subr.mxu0 0.0
    %1161 = vmatpush1.msra.mxu0 %v1136
    %1162 = vmatprep.subr.mxu0 0.0
    %1163 = vmatpush1.msra.mxu0 %v1137
    %1164 = vmatprep.subr.mxu0 0.0
    %1165 = vmatpush1.msra.mxu0 %v1138
    %1166 = vmatprep.subr.mxu0 0.0
    %1167 = vmatpush1.msra.mxu0 0.0
    %1168 = vmatprep.subr.mxu0 0.0
    %1169 = vmatpush1.msra.mxu0 0.0
    %1170 = vmatprep.subr.mxu0 0.0
    %1171 = vmatpush1.msra.mxu0 0.0
    %1172 = vmatprep.subr.mxu0 0.0
    %1173 = vmatpush1.msra.mxu0 0.0
    %1174 = vmatprep.subr.mxu0 0.0
    %1175 = vmatpush1.msra.mxu0 0.0
    %1176 = vmatprep.subr.mxu0 0.0
    %1177 = vmatpush1.msra.mxu0 0.0
    %1178 = vmatprep.subr.mxu0 0.0
    %1179 = vmatpush1.msra.mxu0 0.0
    %1180 = vmatprep.subr.mxu0 0.0
    %1181 = vmatpush1.msra.mxu0 0.0
    %1182 = vmatprep.subr.mxu0 0.0
    %1183 = vmatpush1.msra.mxu0 0.0
    %1184 = vmatprep.subr.mxu0 0.0
    %1185 = vmatpush1.msra.mxu0 0.0
    %1186 = vmatprep.subr.mxu0 0.0
    %1187 = vmatpush1.msra.mxu0 0.0
    %1188 = vmatprep.subr.mxu0 0.0
    %1189 = vmatpush1.msra.mxu0 0.0
    %1190 = vmatprep.subr.mxu0 0.0
    %1191 = vmatpush1.msra.mxu0 0.0
    %1192 = vmatprep.subr.mxu0 0.0
    %1193 = vmatpush1.msra.mxu0 0.0
    %1194 = vmatprep.subr.mxu0 0.0
    %1195 = vmatpush1.msra.mxu0 0.0
    %1196 = vmatprep.subr.mxu0 0.0
    %1197 = vmatpush1.msra.mxu0 0.0
    %1198 = vmatprep.subr.mxu0 0.0
    %1199 = vmatpush1.msra.mxu0 0.0
    %1200 = vmatprep.subr.mxu0 0.0
    %1201 = vmatpush1.msra.mxu0 0.0
    %1202 = vmatprep.subr.mxu0 0.0
    %1203 = vmatpush1.msra.mxu0 0.0
    %1204 = vmatprep.subr.mxu0 0.0
    %1205 = vmatpush1.msra.mxu0 0.0
    %1206 = vmatprep.subr.mxu0 0.0
    %1207 = vmatpush1.msra.mxu0 0.0
    %1208 = vmatprep.subr.mxu0 0.0
    %1209 = vmatpush1.msra.mxu0 0.0
    %1210 = vmatprep.subr.mxu0 0.0
    %1211 = vmatpush1.msra.mxu0 0.0
    %1212 = vmatprep.subr.mxu0 0.0
    %1213 = vmatpush1.msra.mxu0 0.0
    %1214 = vmatprep.mubr.f32.mxu0 0.0
    %1215 = vmatmul.mubr.f32.gmra.mrb[0].mxu0 %v1148
    %v1216 = vpop.f32.mrb[0].mxu0
    %v1217 = vadd.f32 %v1144, %v1216
    %v1218 = vpop.f32.mrb[0].mxu0
    %1219 = vdwg.mxu0
    %1220 = vst [vmem:[#allocation7] sm:$0x3] %v1217
    // Predicated region
    $region34: #{lstm_squat_classifier.1} parent=1 // pred_check
      _
    $region35: #{lstm_squat_classifier.1} parent=1 // pred_check_branch
      %1222 = sbr.rel (0) target = $region37
    $region36: #{lstm_squat_classifier.1} parent=1 // pred_region
      %s1224 = ssub.s32 32, 32
      %1225 = vsyncadd [#allocation4], %s1224
      %s1227 = sshll.u32 [#allocation7], 4
      %s1228 = int_to_ptr.vmem [resolvable:$true] %s1227
      %1230 = dma.vmem_to_hbm [thread:$0]  %s1228, 32, %s6, [#allocation4]
    $region37: #{lstm_squat_classifier.1} parent=1 // pred_fallthru
      _
    // Predicated region
    $region38: #{lstm_squat_classifier.1} parent=1 // pred_check
      _
    $region39: #{lstm_squat_classifier.1} parent=1 // pred_check_branch
      %1232 = sbr.rel (0) target = $region41
    $region40: #{lstm_squat_classifier.1} parent=1 // pred_region
      %1233 = dma.done [#allocation4], 32
    $region41: #{lstm_squat_classifier.1} parent=1 // pred_fallthru
      _
    %1234 = vsyncpa [#allocation3], 1
    %1235 = vsyncpa [#allocation6], 1
    %1236 = vsyncpa [#allocation4], 1

</llo_original>
